<compile_context>
chip_gen: v7x
topology: tpu7x:2x2x1
jax: 0.10.0
libtpu: 0.0.40
codegen_flags: <defaults>
</compile_context>

<pallas_src>
import functools

import jax
import jax.numpy as jnp
from jax.experimental import pallas as pl
from jax.experimental.pallas import tpu as pltpu


def _round_up(x, m):
    return (x + m - 1) // m * m


def _vmem_capacity_bytes():
    """Physical VMEM of the current TPU generation (conservative fallback)."""
    try:
        cap = getattr(pltpu.get_tpu_info(), "vmem_capacity_bytes", None)
        if cap:
            return int(cap)
    except Exception:
        pass
    return 64 << 20  # assume the smallest (v7x-class) VMEM if the query fails


def _generation_params():
    """(per-call VMEM budget, batch-tile cap, scoped-VMEM limit) per TPU gen."""
    if _vmem_capacity_bytes() >= (96 << 20):       # v5e / v6e: 128 MiB VMEM
        return 40 << 20, 512, 64 << 20
    return 18 << 20, 256, 32 << 20                 # v7x: 64 MiB physical


def _pick_batch_tile(b, c, hw, n_pad, in_itemsize, budget_bytes, tb_cap):
    """Largest multiple-of-8 batch tile whose working set fits `budget_bytes`.

    Footprints use the real VMEM layout padding: the last block dim rounds up
    to 128 lanes, the second-to-last to 8 sublanes.  Inputs and outputs are
    counted double-buffered; the weight is resident (2 buffers, worst case).
    """
    in_row = _round_up(c, 8) * _round_up(hw, 128) * in_itemsize       # (TB, C, HW)
    feat_row = _round_up(c, 128) * 4                                   # (TB, C)
    log_row = _round_up(n_pad, 128) * 4                                # (TB, Npad)
    per_row = 2 * in_row + 2 * (feat_row + log_row)
    weight = 2 * _round_up(n_pad, 8) * _round_up(c, 128) * 4
    rows = max(8, (budget_bytes - weight) // max(per_row, 1))
    tb = max(8, (rows // 8) * 8)
    tb = min(tb, tb_cap)
    tb = min(tb, _round_up(b, 8))     # don't over-pad tiny batches
    return tb


def _cskd_kernel(x_ref, wn_ref, feat_ref, logits_ref, *, temperature, inv_hw):
    # x_ref:      (TB, C, HW)  backbone feature-map tile, native dtype,
    #                          contiguous reshape of NCHW (HW on the lane axis)
    # wn_ref:     (Npad, C)    L2-normalized fc.weight (f32), resident
    # feat_ref:   (TB, C)      pooled embedding output
    # logits_ref: (TB, Npad)   cosine logits output (lane-dense padded N)
    x = x_ref[...].astype(jnp.float32)          # upcast AFTER the native-dtype load

    # adaptive_avg_pool2d(x, 1): lane-axis (XLU) reduction over HW; the tiny
    # (TB, C) pooled tile then gets relaid out for the dot (cheap).
    pooled = jnp.sum(x, axis=-1) * jnp.float32(inv_hw)                 # (TB, C)
    feat_ref[...] = pooled.astype(feat_ref.dtype)

    # F.normalize(pooled, p=2, dim=-1) == v * rsqrt(max(sum(v^2), eps^2)),
    # identical to v / max(||v||, eps) with eps = 1e-12.  rsqrt runs on the
    # EUP slot; temperature is folded into the (TB, 1) scale (exact).
    sumsq = jnp.sum(pooled * pooled, axis=-1, keepdims=True)
    inv_norm = jax.lax.rsqrt(jnp.maximum(sumsq, jnp.float32(1e-24)))
    xn_t = pooled * (jnp.float32(temperature) * inv_norm)

    # temperature * (x_norm @ w_norm.T): f32 operands, f32 accumulation.
    logits = jax.lax.dot_general(
        xn_t, wn_ref[...],
        dimension_numbers=(((1,), (1,)), ((), ())),
        preferred_element_type=jnp.float32)
    logits_ref[...] = logits.astype(logits_ref.dtype)


def cskd_forward(feat_map_nchw, fc_weight, temperature):
    """CSKD 'cos'-mode head.

    feat_map_nchw: (B, C, H, W) backbone output (PyTorch NCHW layout, f32 or bf16).
    fc_weight:     (N, C)       nn.Linear(num_features, base_class, bias=False).
    Returns (embedding (B, C) f32, logits (B, N) f32).
    """
    B, C, H, W = feat_map_nchw.shape
    N = fc_weight.shape[0]
    HW = H * W

    # Free contiguous reshape only -- no transpose, no dtype cast: the kernel
    # reads the feature map exactly once from HBM, in its native dtype.
    x = feat_map_nchw.reshape(B, C, HW)

    Npad = _round_up(N, 128)          # lane-dense logits stores
    budget, tb_cap, vmem_limit = _generation_params()
    TB = _pick_batch_tile(B, C, HW, Npad, x.dtype.itemsize, budget, tb_cap)

    # Megacore (v7x has 2 TensorCores): guarantee >= 2 grid blocks whenever the
    # batch is big enough to split, so the "parallel" axis actually shards.
    if pl.cdiv(B, TB) < 2 and B > 8:
        TB = max(8, (TB // 2) // 8 * 8)

    # Batch-independent weight normalization hoisted out of the kernel body:
    # done once per call instead of once per batch tile.  Zero padding rows
    # stay zero after normalization (0 * rsqrt(eps^2) == 0), so padded logits
    # columns are exactly 0 and get sliced off below.
    w = fc_weight.astype(jnp.float32)
    w_sumsq = jnp.sum(w * w, axis=-1, keepdims=True)
    wn = w * jax.lax.rsqrt(jnp.maximum(w_sumsq, jnp.float32(1e-24)))
    if Npad != N:
        wn = jnp.pad(wn, ((0, Npad - N), (0, 0)))

    grid = (pl.cdiv(B, TB),)
    kernel = functools.partial(
        _cskd_kernel, temperature=float(temperature), inv_hw=1.0 / HW)

    cost = pl.CostEstimate(
        flops=int(B * (HW * C + 5 * C + 2 * C * Npad)),
        transcendentals=int(B),
        bytes_accessed=int(B * HW * C * x.dtype.itemsize
                           + B * (C + Npad) * 4 + Npad * C * 4),
    )

    feat, logits = pl.pallas_call(
        kernel,
        out_shape=(
            jax.ShapeDtypeStruct((B, C), jnp.float32),
            jax.ShapeDtypeStruct((B, Npad), jnp.float32),
        ),
        grid=grid,
        in_specs=[
            pl.BlockSpec((TB, C, HW), lambda i: (i, 0, 0)),   # batch-tiled input
            # Resident weight (constant index map).  pl.Buffered(1) would save
            # one ~64 KiB buffer here; skipped as negligible on this kernel.
            pl.BlockSpec((Npad, C), lambda i: (0, 0)),
        ],
        out_specs=(
            # TODO(synk): feat's last dim (C=64 on cifar) stores via masked
            # vst; its traffic is ~1/HW of the input read, so left as-is.
            pl.BlockSpec((TB, C), lambda i: (i, 0)),
            pl.BlockSpec((TB, Npad), lambda i: (i, 0)),
        ),
        compiler_params=pltpu.CompilerParams(
            dimension_semantics=("parallel",),                # megacore on v7x
            vmem_limit_bytes=vmem_limit,
        ),
        cost_estimate=cost,
    )(x, wn)

    return feat, logits[:, :N]


def cskd_reference(feat_map_nchw, fc_weight, temperature):
    B, C, H, W = feat_map_nchw.shape
    pooled = jnp.mean(feat_map_nchw.astype(jnp.float32).reshape(B, C, H * W), axis=-1)
    eps = 1e-12
    xn = pooled / jnp.maximum(jnp.linalg.norm(pooled, axis=-1, keepdims=True), eps)
    w = fc_weight.astype(jnp.float32)
    wn = w / jnp.maximum(jnp.linalg.norm(w, axis=-1, keepdims=True), eps)
    return pooled, temperature * (xn @ wn.T)


if __name__ == "__main__":
    # cifar100 config of CSKD: num_features = 64, backbone final map is 8x8.
    B, C, H, W = 2, 64, 8, 8
    base_class = 16          # args.base_class (small, synthetic)
    temperature = 16.0       # args.temperature

    key = jax.random.PRNGKey(0)
    k_feat, k_fc = jax.random.split(key)
    feat_map = jax.random.normal(k_feat, (B, C, H, W), dtype=jnp.float32)
    # nn.Linear(num_features, base_class, bias=False) weight: (base_class, C)
    bound = 1.0 / jnp.sqrt(jnp.float32(C))
    fc_weight = jax.random.uniform(
        k_fc, (base_class, C), dtype=jnp.float32, minval=-bound, maxval=bound)

    feat, logits = cskd_forward(feat_map, fc_weight, temperature)
    jax.block_until_ready((feat, logits))

    feat_ref, logits_ref = cskd_reference(feat_map, fc_weight, temperature)
    assert feat.shape == (B, C) and logits.shape == (B, base_class)
    assert jnp.allclose(feat, feat_ref, atol=1e-5, rtol=1e-5)
    # Operands are f32 now (bf16 casts dropped); the remaining margin only
    # covers possible default-matmul-precision differences between the Mosaic
    # and XLA lowerings of an f32 dot (vastly tighter than the old 1e-1).
    assert jnp.allclose(logits, logits_ref, atol=3e-2, rtol=1e-2)

    print("KERNEL_OK")
</pallas_src>

<mosaic_0001>
module attributes {stable_mosaic.version = 11 : i64} {
  func.func @_cskd_kernel(%arg0: i32, %arg1: memref<8x64x64xf32, #tpu.memory_space<vmem>>, %arg2: memref<128x64xf32, #tpu.memory_space<vmem>>, %arg3: memref<8x64xf32, #tpu.memory_space<vmem>>, %arg4: memref<8x128xf32, #tpu.memory_space<vmem>>) attributes {dimension_semantics = [#tpu.dimension_semantics<parallel>], iteration_bounds = array<i64: 1>, scalar_prefetch = 0 : i64, scratch_operands = 0 : i64, tpu.core_type = #tpu.core_type<tc>, window_params = [{transform_indices = @transform_0, window_bounds = array<i64: 8, 64, 64>}, {pipeline_mode = #tpu.pipeline_mode<synchronous>, transform_indices = @transform_1, window_bounds = array<i64: 128, 64>}, {transform_indices = @transform_2, window_bounds = array<i64: 8, 64>}, {transform_indices = @transform_3, window_bounds = array<i64: 8, 128>}]} {
    %c0 = arith.constant 0 : index
    %c0_0 = arith.constant 0 : index
    %c0_1 = arith.constant 0 : index
    %0 = vector.load %arg1[%c0, %c0_0, %c0_1] : memref<8x64x64xf32, #tpu.memory_space<vmem>>, vector<8x64x64xf32>
    %cst = arith.constant dense<0.000000e+00> : vector<8x64xf32>
    %1 = vector.multi_reduction <add>, %0, %cst [2] : vector<8x64x64xf32> to vector<8x64xf32>
    %cst_2 = arith.constant 1.562500e-02 : f32
    %2 = vector.broadcast %cst_2 : f32 to vector<8x64xf32>
    %3 = arith.mulf %1, %2 : vector<8x64xf32>
    %c0_3 = arith.constant 0 : index
    %c0_4 = arith.constant 0 : index
    %4 = vector.load %arg3[%c0_3, %c0_4] : memref<8x64xf32, #tpu.memory_space<vmem>>, vector<8x64xf32>
    tpu.vector_store %arg3[%c0_3, %c0_4], %3 {strides = array<i32>} : memref<8x64xf32, #tpu.memory_space<vmem>>, vector<8x64xf32>,
    %5 = arith.mulf %3, %3 : vector<8x64xf32>
    %cst_5 = arith.constant dense<0.000000e+00> : vector<8xf32>
    %6 = vector.multi_reduction <add>, %5, %cst_5 [1] : vector<8x64xf32> to vector<8xf32>
    %7 = vector.shape_cast %6 : vector<8xf32> to vector<8x1xf32>
    %cst_6 = arith.constant 1.000000e-24 : f32
    %8 = vector.broadcast %cst_6 : f32 to vector<8x1xf32>
    %9 = arith.maximumf %7, %8 : vector<8x1xf32>
    %10 = math.rsqrt %9 : vector<8x1xf32>
    %cst_7 = arith.constant 1.600000e+01 : f32
    %11 = vector.broadcast %cst_7 : f32 to vector<8x1xf32>
    %12 = arith.mulf %11, %10 : vector<8x1xf32>
    %13 = vector.broadcast %12 : vector<8x1xf32> to vector<8x64xf32>
    %14 = arith.mulf %3, %13 : vector<8x64xf32>
    %c0_8 = arith.constant 0 : index
    %c0_9 = arith.constant 0 : index
    %15 = vector.load %arg2[%c0_8, %c0_9] : memref<128x64xf32, #tpu.memory_space<vmem>>, vector<128x64xf32>
    %cst_10 = arith.constant dense<0.000000e+00> : vector<8x128xf32>
    %16 = tpu.matmul %14, %15, %cst_10 {dimension_numbers = #tpu.dot_dimension_numbers<[1], [1], [0], [0], [0, 0, 1, 0], [], []>} : vector<8x64xf32>, vector<128x64xf32>, vector<8x128xf32> -> vector<8x128xf32>
    %c0_11 = arith.constant 0 : index
    %c0_12 = arith.constant 0 : index
    %17 = vector.load %arg4[%c0_11, %c0_12] : memref<8x128xf32, #tpu.memory_space<vmem>>, vector<8x128xf32>
    tpu.vector_store %arg4[%c0_11, %c0_12], %16 {strides = array<i32>} : memref<8x128xf32, #tpu.memory_space<vmem>>, vector<8x128xf32>,
    return
  }
  func.func @transform_0(%arg0: i32) -> (i32, i32, i32) {
    %c0_i32 = arith.constant 0 : i32
    %c0_i32_0 = arith.constant 0 : i32
    %c0_i32_1 = arith.constant 0 : i32
    return %arg0, %c0_i32, %c0_i32_0 : i32, i32, i32
  }
  func.func @transform_1(%arg0: i32) -> (i32, i32) {
    %c0_i32 = arith.constant 0 : i32
    %c0_i32_0 = arith.constant 0 : i32
    %c0_i32_1 = arith.constant 0 : i32
    return %c0_i32, %c0_i32_0 : i32, i32
  }
  func.func @transform_2(%arg0: i32) -> (i32, i32) {
    %c0_i32 = arith.constant 0 : i32
    %c0_i32_0 = arith.constant 0 : i32
    return %arg0, %c0_i32 : i32, i32
  }
  func.func @transform_3(%arg0: i32) -> (i32, i32) {
    %c0_i32 = arith.constant 0 : i32
    %c0_i32_0 = arith.constant 0 : i32
    return %arg0, %c0_i32 : i32, i32
  }
}

</mosaic_0001>

<llo_original>
// kernel: tpu_custom_call.1
$region0: #{tpu_custom_call.1}
  #allocation0 [shape = 'u32[]', space=smem, size = 0x4, offset = 0x4, fixed_abs, tag = 'smem constant byte address 0x4 - core index']
  #allocation1 [shape = 'u32[144,128]{1,0:T(1,128)}', space=vmem, size = 0x12000, scoped, tag = 'internal scratch']
  %s0 = inlined_call_operand.vmem [shape: f32[2,64,64], index: 0, kind: input, shape index: {}]
  %s1 = inlined_call_operand.vmem [shape: f32[128,64], index: 1, kind: input, shape index: {}]
  %s2 = inlined_call_operand.hbm [shape: f32[2,64], index: 2, kind: output, shape index: {0}]
  %s3 = inlined_call_operand.hbm [shape: f32[2,128], index: 3, kind: output, shape index: {1}]
  %4 = xla_tuple %s2, %s3
  %s5 = sld [smem:[#allocation0]]
  $region26: #{tpu_custom_call.1} parent=0
    _
  %s7 = ssub.s32 1, %s5
  %s8 = scalar_select 0, %s7, %s5
  $region1: #{tpu_custom_call.1} parent=0
    #allocation2 [shape = 'u8[4096]{0}', space=vmem, size = 0x1000, scoped, tag = 'output window, operand 0, single buffered']
    #allocation3 [shape = 's32[1]{0}', space=sflag, size = 0x4, scoped, tag = 'scoped memory for tpu_custom_call.1']
    #allocation4 [shape = 'u8[4096]{0}', space=vmem, size = 0x1000, scoped, tag = 'output window, operand 1, single buffered']
    #allocation5 [shape = 's32[1]{0}', space=sflag, size = 0x4, scoped, tag = 'scoped memory for tpu_custom_call.1']
    %9 = vsyncpa [#allocation3], 0
    %10 = vsyncpa [#allocation5], 0
    // Predicated region
    $region2: #{tpu_custom_call.1} parent=1 // pred_check
      _
    $region3: #{tpu_custom_call.1} parent=1 // pred_check_branch
      %12 = sbr.rel (0) target = $region5
    $region4: #{tpu_custom_call.1} parent=1 // pred_region
      _
    $region5: #{tpu_custom_call.1} parent=1 // pred_fallthru
      _
    // Predicated region
    $region6: #{tpu_custom_call.1} parent=1 // pred_check
      _
    $region7: #{tpu_custom_call.1} parent=1 // pred_check_branch
      %14 = sbr.rel (0) target = $region9
    $region8: #{tpu_custom_call.1} parent=1 // pred_region
      _
    $region9: #{tpu_custom_call.1} parent=1 // pred_fallthru
      _
    %v15 = vld [vmem:[%s0] sm:$0xff]
    %v16 = vld [vmem:[%s0 + $0x8] sm:$0xff]
    %v17 = vld [vmem:[%s0 + $0x10] sm:$0xff]
    %v18 = vld [vmem:[%s0 + $0x18] sm:$0xff]
    %v19 = vld [vmem:[%s0 + $0x20] sm:$0xff]
    %v20 = vld [vmem:[%s0 + $0x28] sm:$0xff]
    %v21 = vld [vmem:[%s0 + $0x30] sm:$0xff]
    %v22 = vld [vmem:[%s0 + $0x38] sm:$0xff]
    %v23 = vld [vmem:[%s0 + $0x40] sm:$0xff]
    %v24 = vld [vmem:[%s0 + $0x48] sm:$0xff]
    %v25 = vld [vmem:[%s0 + $0x50] sm:$0xff]
    %v26 = vld [vmem:[%s0 + $0x58] sm:$0xff]
    %v27 = vld [vmem:[%s0 + $0x60] sm:$0xff]
    %v28 = vld [vmem:[%s0 + $0x68] sm:$0xff]
    %v29 = vld [vmem:[%s0 + $0x70] sm:$0xff]
    %v30 = vld [vmem:[%s0 + $0x78] sm:$0xff]
    %v31 = vld [vmem:[%s0 + $0x80] sm:$0xff]
    %v32 = vld [vmem:[%s0 + $0x88] sm:$0xff]
    %v33 = vld [vmem:[%s0 + $0x90] sm:$0xff]
    %v34 = vld [vmem:[%s0 + $0x98] sm:$0xff]
    %v35 = vld [vmem:[%s0 + $0xa0] sm:$0xff]
    %v36 = vld [vmem:[%s0 + $0xa8] sm:$0xff]
    %v37 = vld [vmem:[%s0 + $0xb0] sm:$0xff]
    %v38 = vld [vmem:[%s0 + $0xb8] sm:$0xff]
    %v39 = vld [vmem:[%s0 + $0xc0] sm:$0xff]
    %v40 = vld [vmem:[%s0 + $0xc8] sm:$0xff]
    %v41 = vld [vmem:[%s0 + $0xd0] sm:$0xff]
    %v42 = vld [vmem:[%s0 + $0xd8] sm:$0xff]
    %v43 = vld [vmem:[%s0 + $0xe0] sm:$0xff]
    %v44 = vld [vmem:[%s0 + $0xe8] sm:$0xff]
    %v45 = vld [vmem:[%s0 + $0xf0] sm:$0xff]
    %v46 = vld [vmem:[%s0 + $0xf8] sm:$0xff]
    %v47 = vld [vmem:[%s0 + $0x100] sm:$0xff]
    %v48 = vld [vmem:[%s0 + $0x108] sm:$0xff]
    %v49 = vld [vmem:[%s0 + $0x110] sm:$0xff]
    %v50 = vld [vmem:[%s0 + $0x118] sm:$0xff]
    %v51 = vld [vmem:[%s0 + $0x120] sm:$0xff]
    %v52 = vld [vmem:[%s0 + $0x128] sm:$0xff]
    %v53 = vld [vmem:[%s0 + $0x130] sm:$0xff]
    %v54 = vld [vmem:[%s0 + $0x138] sm:$0xff]
    %v55 = vld [vmem:[%s0 + $0x140] sm:$0xff]
    %v56 = vld [vmem:[%s0 + $0x148] sm:$0xff]
    %v57 = vld [vmem:[%s0 + $0x150] sm:$0xff]
    %v58 = vld [vmem:[%s0 + $0x158] sm:$0xff]
    %v59 = vld [vmem:[%s0 + $0x160] sm:$0xff]
    %v60 = vld [vmem:[%s0 + $0x168] sm:$0xff]
    %v61 = vld [vmem:[%s0 + $0x170] sm:$0xff]
    %v62 = vld [vmem:[%s0 + $0x178] sm:$0xff]
    %v63 = vld [vmem:[%s0 + $0x180] sm:$0xff]
    %v64 = vld [vmem:[%s0 + $0x188] sm:$0xff]
    %v65 = vld [vmem:[%s0 + $0x190] sm:$0xff]
    %v66 = vld [vmem:[%s0 + $0x198] sm:$0xff]
    %v67 = vld [vmem:[%s0 + $0x1a0] sm:$0xff]
    %v68 = vld [vmem:[%s0 + $0x1a8] sm:$0xff]
    %v69 = vld [vmem:[%s0 + $0x1b0] sm:$0xff]
    %v70 = vld [vmem:[%s0 + $0x1b8] sm:$0xff]
    %v71 = vld [vmem:[%s0 + $0x1c0] sm:$0xff]
    %v72 = vld [vmem:[%s0 + $0x1c8] sm:$0xff]
    %v73 = vld [vmem:[%s0 + $0x1d0] sm:$0xff]
    %v74 = vld [vmem:[%s0 + $0x1d8] sm:$0xff]
    %v75 = vld [vmem:[%s0 + $0x1e0] sm:$0xff]
    %v76 = vld [vmem:[%s0 + $0x1e8] sm:$0xff]
    %v77 = vld [vmem:[%s0 + $0x1f0] sm:$0xff]
    %v78 = vld [vmem:[%s0 + $0x1f8] sm:$0xff]
    %vm79 = vcmask 523264
    %v80 = vsel %vm79, %v15, 0.0
    %81 = vadd.xlane.f32.xlu0 %v80
    %v82 = vpop.xlane.xlu0 %81
    %v83 = vsel %vm79, %v16, 0.0
    %84 = vadd.xlane.f32.xlu0 %v83
    %v85 = vpop.xlane.xlu0 %84
    %v86 = vsel %vm79, %v17, 0.0
    %87 = vadd.xlane.f32.xlu0 %v86
    %v88 = vpop.xlane.xlu0 %87
    %v89 = vsel %vm79, %v18, 0.0
    %90 = vadd.xlane.f32.xlu0 %v89
    %v91 = vpop.xlane.xlu0 %90
    %v92 = vsel %vm79, %v19, 0.0
    %93 = vadd.xlane.f32.xlu0 %v92
    %v94 = vpop.xlane.xlu0 %93
    %v95 = vsel %vm79, %v20, 0.0
    %96 = vadd.xlane.f32.xlu0 %v95
    %v97 = vpop.xlane.xlu0 %96
    %v98 = vsel %vm79, %v21, 0.0
    %99 = vadd.xlane.f32.xlu0 %v98
    %v100 = vpop.xlane.xlu0 %99
    %v101 = vsel %vm79, %v22, 0.0
    %102 = vadd.xlane.f32.xlu0 %v101
    %v103 = vpop.xlane.xlu0 %102
    %v104 = vsel %vm79, %v23, 0.0
    %105 = vadd.xlane.f32.xlu0 %v104
    %v106 = vpop.xlane.xlu0 %105
    %v107 = vsel %vm79, %v24, 0.0
    %108 = vadd.xlane.f32.xlu0 %v107
    %v109 = vpop.xlane.xlu0 %108
    %v110 = vsel %vm79, %v25, 0.0
    %111 = vadd.xlane.f32.xlu0 %v110
    %v112 = vpop.xlane.xlu0 %111
    %v113 = vsel %vm79, %v26, 0.0
    %114 = vadd.xlane.f32.xlu0 %v113
    %v115 = vpop.xlane.xlu0 %114
    %v116 = vsel %vm79, %v27, 0.0
    %117 = vadd.xlane.f32.xlu0 %v116
    %v118 = vpop.xlane.xlu0 %117
    %v119 = vsel %vm79, %v28, 0.0
    %120 = vadd.xlane.f32.xlu0 %v119
    %v121 = vpop.xlane.xlu0 %120
    %v122 = vsel %vm79, %v29, 0.0
    %123 = vadd.xlane.f32.xlu0 %v122
    %v124 = vpop.xlane.xlu0 %123
    %v125 = vsel %vm79, %v30, 0.0
    %126 = vadd.xlane.f32.xlu0 %v125
    %v127 = vpop.xlane.xlu0 %126
    %v128 = vsel %vm79, %v31, 0.0
    %129 = vadd.xlane.f32.xlu0 %v128
    %v130 = vpop.xlane.xlu0 %129
    %v131 = vsel %vm79, %v32, 0.0
    %132 = vadd.xlane.f32.xlu0 %v131
    %v133 = vpop.xlane.xlu0 %132
    %v134 = vsel %vm79, %v33, 0.0
    %135 = vadd.xlane.f32.xlu0 %v134
    %v136 = vpop.xlane.xlu0 %135
    %v137 = vsel %vm79, %v34, 0.0
    %138 = vadd.xlane.f32.xlu0 %v137
    %v139 = vpop.xlane.xlu0 %138
    %v140 = vsel %vm79, %v35, 0.0
    %141 = vadd.xlane.f32.xlu0 %v140
    %v142 = vpop.xlane.xlu0 %141
    %v143 = vsel %vm79, %v36, 0.0
    %144 = vadd.xlane.f32.xlu0 %v143
    %v145 = vpop.xlane.xlu0 %144
    %v146 = vsel %vm79, %v37, 0.0
    %147 = vadd.xlane.f32.xlu0 %v146
    %v148 = vpop.xlane.xlu0 %147
    %v149 = vsel %vm79, %v38, 0.0
    %150 = vadd.xlane.f32.xlu0 %v149
    %v151 = vpop.xlane.xlu0 %150
    %v152 = vsel %vm79, %v39, 0.0
    %153 = vadd.xlane.f32.xlu0 %v152
    %v154 = vpop.xlane.xlu0 %153
    %v155 = vsel %vm79, %v40, 0.0
    %156 = vadd.xlane.f32.xlu0 %v155
    %v157 = vpop.xlane.xlu0 %156
    %v158 = vsel %vm79, %v41, 0.0
    %159 = vadd.xlane.f32.xlu0 %v158
    %v160 = vpop.xlane.xlu0 %159
    %v161 = vsel %vm79, %v42, 0.0
    %162 = vadd.xlane.f32.xlu0 %v161
    %v163 = vpop.xlane.xlu0 %162
    %v164 = vsel %vm79, %v43, 0.0
    %165 = vadd.xlane.f32.xlu0 %v164
    %v166 = vpop.xlane.xlu0 %165
    %v167 = vsel %vm79, %v44, 0.0
    %168 = vadd.xlane.f32.xlu0 %v167
    %v169 = vpop.xlane.xlu0 %168
    %v170 = vsel %vm79, %v45, 0.0
    %171 = vadd.xlane.f32.xlu0 %v170
    %v172 = vpop.xlane.xlu0 %171
    %v173 = vsel %vm79, %v46, 0.0
    %174 = vadd.xlane.f32.xlu0 %v173
    %v175 = vpop.xlane.xlu0 %174
    %v176 = vsel %vm79, %v47, 0.0
    %177 = vadd.xlane.f32.xlu0 %v176
    %v178 = vpop.xlane.xlu0 %177
    %v179 = vsel %vm79, %v48, 0.0
    %180 = vadd.xlane.f32.xlu0 %v179
    %v181 = vpop.xlane.xlu0 %180
    %v182 = vsel %vm79, %v49, 0.0
    %183 = vadd.xlane.f32.xlu0 %v182
    %v184 = vpop.xlane.xlu0 %183
    %v185 = vsel %vm79, %v50, 0.0
    %186 = vadd.xlane.f32.xlu0 %v185
    %v187 = vpop.xlane.xlu0 %186
    %v188 = vsel %vm79, %v51, 0.0
    %189 = vadd.xlane.f32.xlu0 %v188
    %v190 = vpop.xlane.xlu0 %189
    %v191 = vsel %vm79, %v52, 0.0
    %192 = vadd.xlane.f32.xlu0 %v191
    %v193 = vpop.xlane.xlu0 %192
    %v194 = vsel %vm79, %v53, 0.0
    %195 = vadd.xlane.f32.xlu0 %v194
    %v196 = vpop.xlane.xlu0 %195
    %v197 = vsel %vm79, %v54, 0.0
    %198 = vadd.xlane.f32.xlu0 %v197
    %v199 = vpop.xlane.xlu0 %198
    %v200 = vsel %vm79, %v55, 0.0
    %201 = vadd.xlane.f32.xlu0 %v200
    %v202 = vpop.xlane.xlu0 %201
    %v203 = vsel %vm79, %v56, 0.0
    %204 = vadd.xlane.f32.xlu0 %v203
    %v205 = vpop.xlane.xlu0 %204
    %v206 = vsel %vm79, %v57, 0.0
    %207 = vadd.xlane.f32.xlu0 %v206
    %v208 = vpop.xlane.xlu0 %207
    %v209 = vsel %vm79, %v58, 0.0
    %210 = vadd.xlane.f32.xlu0 %v209
    %v211 = vpop.xlane.xlu0 %210
    %v212 = vsel %vm79, %v59, 0.0
    %213 = vadd.xlane.f32.xlu0 %v212
    %v214 = vpop.xlane.xlu0 %213
    %v215 = vsel %vm79, %v60, 0.0
    %216 = vadd.xlane.f32.xlu0 %v215
    %v217 = vpop.xlane.xlu0 %216
    %v218 = vsel %vm79, %v61, 0.0
    %219 = vadd.xlane.f32.xlu0 %v218
    %v220 = vpop.xlane.xlu0 %219
    %v221 = vsel %vm79, %v62, 0.0
    %222 = vadd.xlane.f32.xlu0 %v221
    %v223 = vpop.xlane.xlu0 %222
    %v224 = vsel %vm79, %v63, 0.0
    %225 = vadd.xlane.f32.xlu0 %v224
    %v226 = vpop.xlane.xlu0 %225
    %v227 = vsel %vm79, %v64, 0.0
    %228 = vadd.xlane.f32.xlu0 %v227
    %v229 = vpop.xlane.xlu0 %228
    %v230 = vsel %vm79, %v65, 0.0
    %231 = vadd.xlane.f32.xlu0 %v230
    %v232 = vpop.xlane.xlu0 %231
    %v233 = vsel %vm79, %v66, 0.0
    %234 = vadd.xlane.f32.xlu0 %v233
    %v235 = vpop.xlane.xlu0 %234
    %v236 = vsel %vm79, %v67, 0.0
    %237 = vadd.xlane.f32.xlu0 %v236
    %v238 = vpop.xlane.xlu0 %237
    %v239 = vsel %vm79, %v68, 0.0
    %240 = vadd.xlane.f32.xlu0 %v239
    %v241 = vpop.xlane.xlu0 %240
    %v242 = vsel %vm79, %v69, 0.0
    %243 = vadd.xlane.f32.xlu0 %v242
    %v244 = vpop.xlane.xlu0 %243
    %v245 = vsel %vm79, %v70, 0.0
    %246 = vadd.xlane.f32.xlu0 %v245
    %v247 = vpop.xlane.xlu0 %246
    %v248 = vsel %vm79, %v71, 0.0
    %249 = vadd.xlane.f32.xlu0 %v248
    %v250 = vpop.xlane.xlu0 %249
    %v251 = vsel %vm79, %v72, 0.0
    %252 = vadd.xlane.f32.xlu0 %v251
    %v253 = vpop.xlane.xlu0 %252
    %v254 = vsel %vm79, %v73, 0.0
    %255 = vadd.xlane.f32.xlu0 %v254
    %v256 = vpop.xlane.xlu0 %255
    %v257 = vsel %vm79, %v74, 0.0
    %258 = vadd.xlane.f32.xlu0 %v257
    %v259 = vpop.xlane.xlu0 %258
    %v260 = vsel %vm79, %v75, 0.0
    %261 = vadd.xlane.f32.xlu0 %v260
    %v262 = vpop.xlane.xlu0 %261
    %v263 = vsel %vm79, %v76, 0.0
    %264 = vadd.xlane.f32.xlu0 %v263
    %v265 = vpop.xlane.xlu0 %264
    %v266 = vsel %vm79, %v77, 0.0
    %267 = vadd.xlane.f32.xlu0 %v266
    %v268 = vpop.xlane.xlu0 %267
    %v269 = vsel %vm79, %v78, 0.0
    %270 = vadd.xlane.f32.xlu0 %v269
    %v271 = vpop.xlane.xlu0 %270
    %v272 = vmul.f32 %v82, 0.015625
    %v273 = vmul.f32 %v85, 0.015625
    %v274 = vmul.f32 %v88, 0.015625
    %v275 = vmul.f32 %v91, 0.015625
    %v276 = vmul.f32 %v94, 0.015625
    %v277 = vmul.f32 %v97, 0.015625
    %v278 = vmul.f32 %v100, 0.015625
    %v279 = vmul.f32 %v103, 0.015625
    %v280 = vmul.f32 %v106, 0.015625
    %v281 = vmul.f32 %v109, 0.015625
    %v282 = vmul.f32 %v112, 0.015625
    %v283 = vmul.f32 %v115, 0.015625
    %v284 = vmul.f32 %v118, 0.015625
    %v285 = vmul.f32 %v121, 0.015625
    %v286 = vmul.f32 %v124, 0.015625
    %v287 = vmul.f32 %v127, 0.015625
    %v288 = vmul.f32 %v130, 0.015625
    %v289 = vmul.f32 %v133, 0.015625
    %v290 = vmul.f32 %v136, 0.015625
    %v291 = vmul.f32 %v139, 0.015625
    %v292 = vmul.f32 %v142, 0.015625
    %v293 = vmul.f32 %v145, 0.015625
    %v294 = vmul.f32 %v148, 0.015625
    %v295 = vmul.f32 %v151, 0.015625
    %v296 = vmul.f32 %v154, 0.015625
    %v297 = vmul.f32 %v157, 0.015625
    %v298 = vmul.f32 %v160, 0.015625
    %v299 = vmul.f32 %v163, 0.015625
    %v300 = vmul.f32 %v166, 0.015625
    %v301 = vmul.f32 %v169, 0.015625
    %v302 = vmul.f32 %v172, 0.015625
    %v303 = vmul.f32 %v175, 0.015625
    %v304 = vmul.f32 %v178, 0.015625
    %v305 = vmul.f32 %v181, 0.015625
    %v306 = vmul.f32 %v184, 0.015625
    %v307 = vmul.f32 %v187, 0.015625
    %v308 = vmul.f32 %v190, 0.015625
    %v309 = vmul.f32 %v193, 0.015625
    %v310 = vmul.f32 %v196, 0.015625
    %v311 = vmul.f32 %v199, 0.015625
    %v312 = vmul.f32 %v202, 0.015625
    %v313 = vmul.f32 %v205, 0.015625
    %v314 = vmul.f32 %v208, 0.015625
    %v315 = vmul.f32 %v211, 0.015625
    %v316 = vmul.f32 %v214, 0.015625
    %v317 = vmul.f32 %v217, 0.015625
    %v318 = vmul.f32 %v220, 0.015625
    %v319 = vmul.f32 %v223, 0.015625
    %v320 = vmul.f32 %v226, 0.015625
    %v321 = vmul.f32 %v229, 0.015625
    %v322 = vmul.f32 %v232, 0.015625
    %v323 = vmul.f32 %v235, 0.015625
    %v324 = vmul.f32 %v238, 0.015625
    %v325 = vmul.f32 %v241, 0.015625
    %v326 = vmul.f32 %v244, 0.015625
    %v327 = vmul.f32 %v247, 0.015625
    %v328 = vmul.f32 %v250, 0.015625
    %v329 = vmul.f32 %v253, 0.015625
    %v330 = vmul.f32 %v256, 0.015625
    %v331 = vmul.f32 %v259, 0.015625
    %v332 = vmul.f32 %v262, 0.015625
    %v333 = vmul.f32 %v265, 0.015625
    %v334 = vmul.f32 %v268, 0.015625
    %v335 = vmul.f32 %v271, 0.015625
    %v400 = vlaneseq
    %v401 = vand.u32 %v400, 127
    %v402 = vlaneseq
    %v403 = vshrl.u32 %v402, 7
    %v404 = vsub.s32 %v401, %v403
    %v405 = vrot.slane %v272, %v404
    %v406 = vadd.s32 %v401, 4294967288
    %v407 = vlaneseq
    %v408 = vshrl.u32 %v407, 7
    %v409 = vsub.s32 %v406, %v408
    %v410 = vrot.slane %v273, %v409
    %vm411 = vcmask 130112
    %v412 = vsel %vm411, %v410, %v405
    %v413 = vadd.s32 %v401, 4294967280
    %v414 = vlaneseq
    %v415 = vshrl.u32 %v414, 7
    %v416 = vsub.s32 %v413, %v415
    %v417 = vrot.slane %v274, %v416
    %vm418 = vcmask 195712
    %v419 = vsel %vm418, %v417, %v412
    %v420 = vadd.s32 %v401, 4294967272
    %v421 = vlaneseq
    %v422 = vshrl.u32 %v421, 7
    %v423 = vsub.s32 %v420, %v422
    %v424 = vrot.slane %v275, %v423
    %vm425 = vcmask 261312
    %v426 = vsel %vm425, %v424, %v419
    %v427 = vadd.s32 %v401, 4294967264
    %v428 = vlaneseq
    %v429 = vshrl.u32 %v428, 7
    %v430 = vsub.s32 %v427, %v429
    %v431 = vrot.slane %v276, %v430
    %vm432 = vcmask 326912
    %v433 = vsel %vm432, %v431, %v426
    %v434 = vadd.s32 %v401, 4294967256
    %v435 = vlaneseq
    %v436 = vshrl.u32 %v435, 7
    %v437 = vsub.s32 %v434, %v436
    %v438 = vrot.slane %v277, %v437
    %vm439 = vcmask 392512
    %v440 = vsel %vm439, %v438, %v433
    %v441 = vadd.s32 %v401, 4294967248
    %v442 = vlaneseq
    %v443 = vshrl.u32 %v442, 7
    %v444 = vsub.s32 %v441, %v443
    %v445 = vrot.slane %v278, %v444
    %vm446 = vcmask 458112
    %v447 = vsel %vm446, %v445, %v440
    %v448 = vadd.s32 %v401, 4294967240
    %v449 = vlaneseq
    %v450 = vshrl.u32 %v449, 7
    %v451 = vsub.s32 %v448, %v450
    %v452 = vrot.slane %v279, %v451
    %vm453 = vcmask 523712
    %v454 = vsel %vm453, %v452, %v447
    %v455 = vlaneseq
    %v456 = vshrl.u32 %v455, 7
    %v457 = vsub.s32 %v401, %v456
    %v458 = vrot.slane %v280, %v457
    %v459 = vlaneseq
    %v460 = vshrl.u32 %v459, 7
    %v461 = vsub.s32 %v406, %v460
    %v462 = vrot.slane %v281, %v461
    %v463 = vsel %vm411, %v462, %v458
    %v464 = vlaneseq
    %v465 = vshrl.u32 %v464, 7
    %v466 = vsub.s32 %v413, %v465
    %v467 = vrot.slane %v282, %v466
    %v468 = vsel %vm418, %v467, %v463
    %v469 = vlaneseq
    %v470 = vshrl.u32 %v469, 7
    %v471 = vsub.s32 %v420, %v470
    %v472 = vrot.slane %v283, %v471
    %v473 = vsel %vm425, %v472, %v468
    %v474 = vlaneseq
    %v475 = vshrl.u32 %v474, 7
    %v476 = vsub.s32 %v427, %v475
    %v477 = vrot.slane %v284, %v476
    %v478 = vsel %vm432, %v477, %v473
    %v479 = vlaneseq
    %v480 = vshrl.u32 %v479, 7
    %v481 = vsub.s32 %v434, %v480
    %v482 = vrot.slane %v285, %v481
    %v483 = vsel %vm439, %v482, %v478
    %v484 = vlaneseq
    %v485 = vshrl.u32 %v484, 7
    %v486 = vsub.s32 %v441, %v485
    %v487 = vrot.slane %v286, %v486
    %v488 = vsel %vm446, %v487, %v483
    %v489 = vlaneseq
    %v490 = vshrl.u32 %v489, 7
    %v491 = vsub.s32 %v448, %v490
    %v492 = vrot.slane %v287, %v491
    %v493 = vsel %vm453, %v492, %v488
    %v494 = vlaneseq
    %v495 = vshrl.u32 %v494, 7
    %v496 = vsub.s32 %v401, %v495
    %v497 = vrot.slane %v288, %v496
    %v498 = vlaneseq
    %v499 = vshrl.u32 %v498, 7
    %v500 = vsub.s32 %v406, %v499
    %v501 = vrot.slane %v289, %v500
    %v502 = vsel %vm411, %v501, %v497
    %v503 = vlaneseq
    %v504 = vshrl.u32 %v503, 7
    %v505 = vsub.s32 %v413, %v504
    %v506 = vrot.slane %v290, %v505
    %v507 = vsel %vm418, %v506, %v502
    %v508 = vlaneseq
    %v509 = vshrl.u32 %v508, 7
    %v510 = vsub.s32 %v420, %v509
    %v511 = vrot.slane %v291, %v510
    %v512 = vsel %vm425, %v511, %v507
    %v513 = vlaneseq
    %v514 = vshrl.u32 %v513, 7
    %v515 = vsub.s32 %v427, %v514
    %v516 = vrot.slane %v292, %v515
    %v517 = vsel %vm432, %v516, %v512
    %v518 = vlaneseq
    %v519 = vshrl.u32 %v518, 7
    %v520 = vsub.s32 %v434, %v519
    %v521 = vrot.slane %v293, %v520
    %v522 = vsel %vm439, %v521, %v517
    %v523 = vlaneseq
    %v524 = vshrl.u32 %v523, 7
    %v525 = vsub.s32 %v441, %v524
    %v526 = vrot.slane %v294, %v525
    %v527 = vsel %vm446, %v526, %v522
    %v528 = vlaneseq
    %v529 = vshrl.u32 %v528, 7
    %v530 = vsub.s32 %v448, %v529
    %v531 = vrot.slane %v295, %v530
    %v532 = vsel %vm453, %v531, %v527
    %v533 = vlaneseq
    %v534 = vshrl.u32 %v533, 7
    %v535 = vsub.s32 %v401, %v534
    %v536 = vrot.slane %v296, %v535
    %v537 = vlaneseq
    %v538 = vshrl.u32 %v537, 7
    %v539 = vsub.s32 %v406, %v538
    %v540 = vrot.slane %v297, %v539
    %v541 = vsel %vm411, %v540, %v536
    %v542 = vlaneseq
    %v543 = vshrl.u32 %v542, 7
    %v544 = vsub.s32 %v413, %v543
    %v545 = vrot.slane %v298, %v544
    %v546 = vsel %vm418, %v545, %v541
    %v547 = vlaneseq
    %v548 = vshrl.u32 %v547, 7
    %v549 = vsub.s32 %v420, %v548
    %v550 = vrot.slane %v299, %v549
    %v551 = vsel %vm425, %v550, %v546
    %v552 = vlaneseq
    %v553 = vshrl.u32 %v552, 7
    %v554 = vsub.s32 %v427, %v553
    %v555 = vrot.slane %v300, %v554
    %v556 = vsel %vm432, %v555, %v551
    %v557 = vlaneseq
    %v558 = vshrl.u32 %v557, 7
    %v559 = vsub.s32 %v434, %v558
    %v560 = vrot.slane %v301, %v559
    %v561 = vsel %vm439, %v560, %v556
    %v562 = vlaneseq
    %v563 = vshrl.u32 %v562, 7
    %v564 = vsub.s32 %v441, %v563
    %v565 = vrot.slane %v302, %v564
    %v566 = vsel %vm446, %v565, %v561
    %v567 = vlaneseq
    %v568 = vshrl.u32 %v567, 7
    %v569 = vsub.s32 %v448, %v568
    %v570 = vrot.slane %v303, %v569
    %v571 = vsel %vm453, %v570, %v566
    %v572 = vlaneseq
    %v573 = vshrl.u32 %v572, 7
    %v574 = vsub.s32 %v401, %v573
    %v575 = vrot.slane %v304, %v574
    %v576 = vlaneseq
    %v577 = vshrl.u32 %v576, 7
    %v578 = vsub.s32 %v406, %v577
    %v579 = vrot.slane %v305, %v578
    %v580 = vsel %vm411, %v579, %v575
    %v581 = vlaneseq
    %v582 = vshrl.u32 %v581, 7
    %v583 = vsub.s32 %v413, %v582
    %v584 = vrot.slane %v306, %v583
    %v585 = vsel %vm418, %v584, %v580
    %v586 = vlaneseq
    %v587 = vshrl.u32 %v586, 7
    %v588 = vsub.s32 %v420, %v587
    %v589 = vrot.slane %v307, %v588
    %v590 = vsel %vm425, %v589, %v585
    %v591 = vlaneseq
    %v592 = vshrl.u32 %v591, 7
    %v593 = vsub.s32 %v427, %v592
    %v594 = vrot.slane %v308, %v593
    %v595 = vsel %vm432, %v594, %v590
    %v596 = vlaneseq
    %v597 = vshrl.u32 %v596, 7
    %v598 = vsub.s32 %v434, %v597
    %v599 = vrot.slane %v309, %v598
    %v600 = vsel %vm439, %v599, %v595
    %v601 = vlaneseq
    %v602 = vshrl.u32 %v601, 7
    %v603 = vsub.s32 %v441, %v602
    %v604 = vrot.slane %v310, %v603
    %v605 = vsel %vm446, %v604, %v600
    %v606 = vlaneseq
    %v607 = vshrl.u32 %v606, 7
    %v608 = vsub.s32 %v448, %v607
    %v609 = vrot.slane %v311, %v608
    %v610 = vsel %vm453, %v609, %v605
    %v611 = vlaneseq
    %v612 = vshrl.u32 %v611, 7
    %v613 = vsub.s32 %v401, %v612
    %v614 = vrot.slane %v312, %v613
    %v615 = vlaneseq
    %v616 = vshrl.u32 %v615, 7
    %v617 = vsub.s32 %v406, %v616
    %v618 = vrot.slane %v313, %v617
    %v619 = vsel %vm411, %v618, %v614
    %v620 = vlaneseq
    %v621 = vshrl.u32 %v620, 7
    %v622 = vsub.s32 %v413, %v621
    %v623 = vrot.slane %v314, %v622
    %v624 = vsel %vm418, %v623, %v619
    %v625 = vlaneseq
    %v626 = vshrl.u32 %v625, 7
    %v627 = vsub.s32 %v420, %v626
    %v628 = vrot.slane %v315, %v627
    %v629 = vsel %vm425, %v628, %v624
    %v630 = vlaneseq
    %v631 = vshrl.u32 %v630, 7
    %v632 = vsub.s32 %v427, %v631
    %v633 = vrot.slane %v316, %v632
    %v634 = vsel %vm432, %v633, %v629
    %v635 = vlaneseq
    %v636 = vshrl.u32 %v635, 7
    %v637 = vsub.s32 %v434, %v636
    %v638 = vrot.slane %v317, %v637
    %v639 = vsel %vm439, %v638, %v634
    %v640 = vlaneseq
    %v641 = vshrl.u32 %v640, 7
    %v642 = vsub.s32 %v441, %v641
    %v643 = vrot.slane %v318, %v642
    %v644 = vsel %vm446, %v643, %v639
    %v645 = vlaneseq
    %v646 = vshrl.u32 %v645, 7
    %v647 = vsub.s32 %v448, %v646
    %v648 = vrot.slane %v319, %v647
    %v649 = vsel %vm453, %v648, %v644
    %v650 = vlaneseq
    %v651 = vshrl.u32 %v650, 7
    %v652 = vsub.s32 %v401, %v651
    %v653 = vrot.slane %v320, %v652
    %v654 = vlaneseq
    %v655 = vshrl.u32 %v654, 7
    %v656 = vsub.s32 %v406, %v655
    %v657 = vrot.slane %v321, %v656
    %v658 = vsel %vm411, %v657, %v653
    %v659 = vlaneseq
    %v660 = vshrl.u32 %v659, 7
    %v661 = vsub.s32 %v413, %v660
    %v662 = vrot.slane %v322, %v661
    %v663 = vsel %vm418, %v662, %v658
    %v664 = vlaneseq
    %v665 = vshrl.u32 %v664, 7
    %v666 = vsub.s32 %v420, %v665
    %v667 = vrot.slane %v323, %v666
    %v668 = vsel %vm425, %v667, %v663
    %v669 = vlaneseq
    %v670 = vshrl.u32 %v669, 7
    %v671 = vsub.s32 %v427, %v670
    %v672 = vrot.slane %v324, %v671
    %v673 = vsel %vm432, %v672, %v668
    %v674 = vlaneseq
    %v675 = vshrl.u32 %v674, 7
    %v676 = vsub.s32 %v434, %v675
    %v677 = vrot.slane %v325, %v676
    %v678 = vsel %vm439, %v677, %v673
    %v679 = vlaneseq
    %v680 = vshrl.u32 %v679, 7
    %v681 = vsub.s32 %v441, %v680
    %v682 = vrot.slane %v326, %v681
    %v683 = vsel %vm446, %v682, %v678
    %v684 = vlaneseq
    %v685 = vshrl.u32 %v684, 7
    %v686 = vsub.s32 %v448, %v685
    %v687 = vrot.slane %v327, %v686
    %v688 = vsel %vm453, %v687, %v683
    %v689 = vlaneseq
    %v690 = vshrl.u32 %v689, 7
    %v691 = vsub.s32 %v401, %v690
    %v692 = vrot.slane %v328, %v691
    %v693 = vlaneseq
    %v694 = vshrl.u32 %v693, 7
    %v695 = vsub.s32 %v406, %v694
    %v696 = vrot.slane %v329, %v695
    %v697 = vsel %vm411, %v696, %v692
    %v698 = vlaneseq
    %v699 = vshrl.u32 %v698, 7
    %v700 = vsub.s32 %v413, %v699
    %v701 = vrot.slane %v330, %v700
    %v702 = vsel %vm418, %v701, %v697
    %v703 = vlaneseq
    %v704 = vshrl.u32 %v703, 7
    %v705 = vsub.s32 %v420, %v704
    %v706 = vrot.slane %v331, %v705
    %v707 = vsel %vm425, %v706, %v702
    %v708 = vlaneseq
    %v709 = vshrl.u32 %v708, 7
    %v710 = vsub.s32 %v427, %v709
    %v711 = vrot.slane %v332, %v710
    %v712 = vsel %vm432, %v711, %v707
    %v713 = vlaneseq
    %v714 = vshrl.u32 %v713, 7
    %v715 = vsub.s32 %v434, %v714
    %v716 = vrot.slane %v333, %v715
    %v717 = vsel %vm439, %v716, %v712
    %v718 = vlaneseq
    %v719 = vshrl.u32 %v718, 7
    %v720 = vsub.s32 %v441, %v719
    %v721 = vrot.slane %v334, %v720
    %v722 = vsel %vm446, %v721, %v717
    %v723 = vlaneseq
    %v724 = vshrl.u32 %v723, 7
    %v725 = vsub.s32 %v448, %v724
    %v726 = vrot.slane %v335, %v725
    %v727 = vsel %vm453, %v726, %v722
    %vm728 = vcmask 1041409
    %v729 = vsel %vm728, %v493, %v454
    %vm730 = vcmask 1042434
    %v731 = vsel %vm730, %v532, %v729
    %vm732 = vcmask 1043459
    %v733 = vsel %vm732, %v571, %v731
    %vm734 = vcmask 1044484
    %v735 = vsel %vm734, %v610, %v733
    %vm736 = vcmask 1045509
    %v737 = vsel %vm736, %v649, %v735
    %vm738 = vcmask 1046534
    %v739 = vsel %vm738, %v688, %v737
    %vm740 = vcmask 1047559
    %v741 = vsel %vm740, %v727, %v739
    %743 = vst.msk [vmem:[#allocation2] sm:$0xff] %vm79, %v741
    %v744 = vmul.f32 %v272, %v272
    %v745 = vmul.f32 %v273, %v273
    %v746 = vmul.f32 %v274, %v274
    %v747 = vmul.f32 %v275, %v275
    %v748 = vmul.f32 %v276, %v276
    %v749 = vmul.f32 %v277, %v277
    %v750 = vmul.f32 %v278, %v278
    %v751 = vmul.f32 %v279, %v279
    %v752 = vmul.f32 %v280, %v280
    %v753 = vmul.f32 %v281, %v281
    %v754 = vmul.f32 %v282, %v282
    %v755 = vmul.f32 %v283, %v283
    %v756 = vmul.f32 %v284, %v284
    %v757 = vmul.f32 %v285, %v285
    %v758 = vmul.f32 %v286, %v286
    %v759 = vmul.f32 %v287, %v287
    %v760 = vmul.f32 %v288, %v288
    %v761 = vmul.f32 %v289, %v289
    %v762 = vmul.f32 %v290, %v290
    %v763 = vmul.f32 %v291, %v291
    %v764 = vmul.f32 %v292, %v292
    %v765 = vmul.f32 %v293, %v293
    %v766 = vmul.f32 %v294, %v294
    %v767 = vmul.f32 %v295, %v295
    %v768 = vmul.f32 %v296, %v296
    %v769 = vmul.f32 %v297, %v297
    %v770 = vmul.f32 %v298, %v298
    %v771 = vmul.f32 %v299, %v299
    %v772 = vmul.f32 %v300, %v300
    %v773 = vmul.f32 %v301, %v301
    %v774 = vmul.f32 %v302, %v302
    %v775 = vmul.f32 %v303, %v303
    %v776 = vmul.f32 %v304, %v304
    %v777 = vmul.f32 %v305, %v305
    %v778 = vmul.f32 %v306, %v306
    %v779 = vmul.f32 %v307, %v307
    %v780 = vmul.f32 %v308, %v308
    %v781 = vmul.f32 %v309, %v309
    %v782 = vmul.f32 %v310, %v310
    %v783 = vmul.f32 %v311, %v311
    %v784 = vmul.f32 %v312, %v312
    %v785 = vmul.f32 %v313, %v313
    %v786 = vmul.f32 %v314, %v314
    %v787 = vmul.f32 %v315, %v315
    %v788 = vmul.f32 %v316, %v316
    %v789 = vmul.f32 %v317, %v317
    %v790 = vmul.f32 %v318, %v318
    %v791 = vmul.f32 %v319, %v319
    %v792 = vmul.f32 %v320, %v320
    %v793 = vmul.f32 %v321, %v321
    %v794 = vmul.f32 %v322, %v322
    %v795 = vmul.f32 %v323, %v323
    %v796 = vmul.f32 %v324, %v324
    %v797 = vmul.f32 %v325, %v325
    %v798 = vmul.f32 %v326, %v326
    %v799 = vmul.f32 %v327, %v327
    %v800 = vmul.f32 %v328, %v328
    %v801 = vmul.f32 %v329, %v329
    %v802 = vmul.f32 %v330, %v330
    %v803 = vmul.f32 %v331, %v331
    %v804 = vmul.f32 %v332, %v332
    %v805 = vmul.f32 %v333, %v333
    %v806 = vmul.f32 %v334, %v334
    %v807 = vmul.f32 %v335, %v335
    %v872 = vlaneseq
    %v873 = vshrl.u32 %v872, 7
    %v874 = vsub.s32 %v401, %v873
    %v875 = vrot.slane %v744, %v874
    %v876 = vlaneseq
    %v877 = vshrl.u32 %v876, 7
    %v878 = vsub.s32 %v406, %v877
    %v879 = vrot.slane %v745, %v878
    %v880 = vsel %vm411, %v879, %v875
    %v881 = vlaneseq
    %v882 = vshrl.u32 %v881, 7
    %v883 = vsub.s32 %v413, %v882
    %v884 = vrot.slane %v746, %v883
    %v885 = vsel %vm418, %v884, %v880
    %v886 = vlaneseq
    %v887 = vshrl.u32 %v886, 7
    %v888 = vsub.s32 %v420, %v887
    %v889 = vrot.slane %v747, %v888
    %v890 = vsel %vm425, %v889, %v885
    %v891 = vlaneseq
    %v892 = vshrl.u32 %v891, 7
    %v893 = vsub.s32 %v427, %v892
    %v894 = vrot.slane %v748, %v893
    %v895 = vsel %vm432, %v894, %v890
    %v896 = vlaneseq
    %v897 = vshrl.u32 %v896, 7
    %v898 = vsub.s32 %v434, %v897
    %v899 = vrot.slane %v749, %v898
    %v900 = vsel %vm439, %v899, %v895
    %v901 = vlaneseq
    %v902 = vshrl.u32 %v901, 7
    %v903 = vsub.s32 %v441, %v902
    %v904 = vrot.slane %v750, %v903
    %v905 = vsel %vm446, %v904, %v900
    %v906 = vlaneseq
    %v907 = vshrl.u32 %v906, 7
    %v908 = vsub.s32 %v448, %v907
    %v909 = vrot.slane %v751, %v908
    %v910 = vsel %vm453, %v909, %v905
    %v911 = vlaneseq
    %v912 = vshrl.u32 %v911, 7
    %v913 = vsub.s32 %v401, %v912
    %v914 = vrot.slane %v752, %v913
    %v915 = vlaneseq
    %v916 = vshrl.u32 %v915, 7
    %v917 = vsub.s32 %v406, %v916
    %v918 = vrot.slane %v753, %v917
    %v919 = vsel %vm411, %v918, %v914
    %v920 = vlaneseq
    %v921 = vshrl.u32 %v920, 7
    %v922 = vsub.s32 %v413, %v921
    %v923 = vrot.slane %v754, %v922
    %v924 = vsel %vm418, %v923, %v919
    %v925 = vlaneseq
    %v926 = vshrl.u32 %v925, 7
    %v927 = vsub.s32 %v420, %v926
    %v928 = vrot.slane %v755, %v927
    %v929 = vsel %vm425, %v928, %v924
    %v930 = vlaneseq
    %v931 = vshrl.u32 %v930, 7
    %v932 = vsub.s32 %v427, %v931
    %v933 = vrot.slane %v756, %v932
    %v934 = vsel %vm432, %v933, %v929
    %v935 = vlaneseq
    %v936 = vshrl.u32 %v935, 7
    %v937 = vsub.s32 %v434, %v936
    %v938 = vrot.slane %v757, %v937
    %v939 = vsel %vm439, %v938, %v934
    %v940 = vlaneseq
    %v941 = vshrl.u32 %v940, 7
    %v942 = vsub.s32 %v441, %v941
    %v943 = vrot.slane %v758, %v942
    %v944 = vsel %vm446, %v943, %v939
    %v945 = vlaneseq
    %v946 = vshrl.u32 %v945, 7
    %v947 = vsub.s32 %v448, %v946
    %v948 = vrot.slane %v759, %v947
    %v949 = vsel %vm453, %v948, %v944
    %v950 = vlaneseq
    %v951 = vshrl.u32 %v950, 7
    %v952 = vsub.s32 %v401, %v951
    %v953 = vrot.slane %v760, %v952
    %v954 = vlaneseq
    %v955 = vshrl.u32 %v954, 7
    %v956 = vsub.s32 %v406, %v955
    %v957 = vrot.slane %v761, %v956
    %v958 = vsel %vm411, %v957, %v953
    %v959 = vlaneseq
    %v960 = vshrl.u32 %v959, 7
    %v961 = vsub.s32 %v413, %v960
    %v962 = vrot.slane %v762, %v961
    %v963 = vsel %vm418, %v962, %v958
    %v964 = vlaneseq
    %v965 = vshrl.u32 %v964, 7
    %v966 = vsub.s32 %v420, %v965
    %v967 = vrot.slane %v763, %v966
    %v968 = vsel %vm425, %v967, %v963
    %v969 = vlaneseq
    %v970 = vshrl.u32 %v969, 7
    %v971 = vsub.s32 %v427, %v970
    %v972 = vrot.slane %v764, %v971
    %v973 = vsel %vm432, %v972, %v968
    %v974 = vlaneseq
    %v975 = vshrl.u32 %v974, 7
    %v976 = vsub.s32 %v434, %v975
    %v977 = vrot.slane %v765, %v976
    %v978 = vsel %vm439, %v977, %v973
    %v979 = vlaneseq
    %v980 = vshrl.u32 %v979, 7
    %v981 = vsub.s32 %v441, %v980
    %v982 = vrot.slane %v766, %v981
    %v983 = vsel %vm446, %v982, %v978
    %v984 = vlaneseq
    %v985 = vshrl.u32 %v984, 7
    %v986 = vsub.s32 %v448, %v985
    %v987 = vrot.slane %v767, %v986
    %v988 = vsel %vm453, %v987, %v983
    %v989 = vlaneseq
    %v990 = vshrl.u32 %v989, 7
    %v991 = vsub.s32 %v401, %v990
    %v992 = vrot.slane %v768, %v991
    %v993 = vlaneseq
    %v994 = vshrl.u32 %v993, 7
    %v995 = vsub.s32 %v406, %v994
    %v996 = vrot.slane %v769, %v995
    %v997 = vsel %vm411, %v996, %v992
    %v998 = vlaneseq
    %v999 = vshrl.u32 %v998, 7
    %v1000 = vsub.s32 %v413, %v999
    %v1001 = vrot.slane %v770, %v1000
    %v1002 = vsel %vm418, %v1001, %v997
    %v1003 = vlaneseq
    %v1004 = vshrl.u32 %v1003, 7
    %v1005 = vsub.s32 %v420, %v1004
    %v1006 = vrot.slane %v771, %v1005
    %v1007 = vsel %vm425, %v1006, %v1002
    %v1008 = vlaneseq
    %v1009 = vshrl.u32 %v1008, 7
    %v1010 = vsub.s32 %v427, %v1009
    %v1011 = vrot.slane %v772, %v1010
    %v1012 = vsel %vm432, %v1011, %v1007
    %v1013 = vlaneseq
    %v1014 = vshrl.u32 %v1013, 7
    %v1015 = vsub.s32 %v434, %v1014
    %v1016 = vrot.slane %v773, %v1015
    %v1017 = vsel %vm439, %v1016, %v1012
    %v1018 = vlaneseq
    %v1019 = vshrl.u32 %v1018, 7
    %v1020 = vsub.s32 %v441, %v1019
    %v1021 = vrot.slane %v774, %v1020
    %v1022 = vsel %vm446, %v1021, %v1017
    %v1023 = vlaneseq
    %v1024 = vshrl.u32 %v1023, 7
    %v1025 = vsub.s32 %v448, %v1024
    %v1026 = vrot.slane %v775, %v1025
    %v1027 = vsel %vm453, %v1026, %v1022
    %v1028 = vlaneseq
    %v1029 = vshrl.u32 %v1028, 7
    %v1030 = vsub.s32 %v401, %v1029
    %v1031 = vrot.slane %v776, %v1030
    %v1032 = vlaneseq
    %v1033 = vshrl.u32 %v1032, 7
    %v1034 = vsub.s32 %v406, %v1033
    %v1035 = vrot.slane %v777, %v1034
    %v1036 = vsel %vm411, %v1035, %v1031
    %v1037 = vlaneseq
    %v1038 = vshrl.u32 %v1037, 7
    %v1039 = vsub.s32 %v413, %v1038
    %v1040 = vrot.slane %v778, %v1039
    %v1041 = vsel %vm418, %v1040, %v1036
    %v1042 = vlaneseq
    %v1043 = vshrl.u32 %v1042, 7
    %v1044 = vsub.s32 %v420, %v1043
    %v1045 = vrot.slane %v779, %v1044
    %v1046 = vsel %vm425, %v1045, %v1041
    %v1047 = vlaneseq
    %v1048 = vshrl.u32 %v1047, 7
    %v1049 = vsub.s32 %v427, %v1048
    %v1050 = vrot.slane %v780, %v1049
    %v1051 = vsel %vm432, %v1050, %v1046
    %v1052 = vlaneseq
    %v1053 = vshrl.u32 %v1052, 7
    %v1054 = vsub.s32 %v434, %v1053
    %v1055 = vrot.slane %v781, %v1054
    %v1056 = vsel %vm439, %v1055, %v1051
    %v1057 = vlaneseq
    %v1058 = vshrl.u32 %v1057, 7
    %v1059 = vsub.s32 %v441, %v1058
    %v1060 = vrot.slane %v782, %v1059
    %v1061 = vsel %vm446, %v1060, %v1056
    %v1062 = vlaneseq
    %v1063 = vshrl.u32 %v1062, 7
    %v1064 = vsub.s32 %v448, %v1063
    %v1065 = vrot.slane %v783, %v1064
    %v1066 = vsel %vm453, %v1065, %v1061
    %v1067 = vlaneseq
    %v1068 = vshrl.u32 %v1067, 7
    %v1069 = vsub.s32 %v401, %v1068
    %v1070 = vrot.slane %v784, %v1069
    %v1071 = vlaneseq
    %v1072 = vshrl.u32 %v1071, 7
    %v1073 = vsub.s32 %v406, %v1072
    %v1074 = vrot.slane %v785, %v1073
    %v1075 = vsel %vm411, %v1074, %v1070
    %v1076 = vlaneseq
    %v1077 = vshrl.u32 %v1076, 7
    %v1078 = vsub.s32 %v413, %v1077
    %v1079 = vrot.slane %v786, %v1078
    %v1080 = vsel %vm418, %v1079, %v1075
    %v1081 = vlaneseq
    %v1082 = vshrl.u32 %v1081, 7
    %v1083 = vsub.s32 %v420, %v1082
    %v1084 = vrot.slane %v787, %v1083
    %v1085 = vsel %vm425, %v1084, %v1080
    %v1086 = vlaneseq
    %v1087 = vshrl.u32 %v1086, 7
    %v1088 = vsub.s32 %v427, %v1087
    %v1089 = vrot.slane %v788, %v1088
    %v1090 = vsel %vm432, %v1089, %v1085
    %v1091 = vlaneseq
    %v1092 = vshrl.u32 %v1091, 7
    %v1093 = vsub.s32 %v434, %v1092
    %v1094 = vrot.slane %v789, %v1093
    %v1095 = vsel %vm439, %v1094, %v1090
    %v1096 = vlaneseq
    %v1097 = vshrl.u32 %v1096, 7
    %v1098 = vsub.s32 %v441, %v1097
    %v1099 = vrot.slane %v790, %v1098
    %v1100 = vsel %vm446, %v1099, %v1095
    %v1101 = vlaneseq
    %v1102 = vshrl.u32 %v1101, 7
    %v1103 = vsub.s32 %v448, %v1102
    %v1104 = vrot.slane %v791, %v1103
    %v1105 = vsel %vm453, %v1104, %v1100
    %v1106 = vlaneseq
    %v1107 = vshrl.u32 %v1106, 7
    %v1108 = vsub.s32 %v401, %v1107
    %v1109 = vrot.slane %v792, %v1108
    %v1110 = vlaneseq
    %v1111 = vshrl.u32 %v1110, 7
    %v1112 = vsub.s32 %v406, %v1111
    %v1113 = vrot.slane %v793, %v1112
    %v1114 = vsel %vm411, %v1113, %v1109
    %v1115 = vlaneseq
    %v1116 = vshrl.u32 %v1115, 7
    %v1117 = vsub.s32 %v413, %v1116
    %v1118 = vrot.slane %v794, %v1117
    %v1119 = vsel %vm418, %v1118, %v1114
    %v1120 = vlaneseq
    %v1121 = vshrl.u32 %v1120, 7
    %v1122 = vsub.s32 %v420, %v1121
    %v1123 = vrot.slane %v795, %v1122
    %v1124 = vsel %vm425, %v1123, %v1119
    %v1125 = vlaneseq
    %v1126 = vshrl.u32 %v1125, 7
    %v1127 = vsub.s32 %v427, %v1126
    %v1128 = vrot.slane %v796, %v1127
    %v1129 = vsel %vm432, %v1128, %v1124
    %v1130 = vlaneseq
    %v1131 = vshrl.u32 %v1130, 7
    %v1132 = vsub.s32 %v434, %v1131
    %v1133 = vrot.slane %v797, %v1132
    %v1134 = vsel %vm439, %v1133, %v1129
    %v1135 = vlaneseq
    %v1136 = vshrl.u32 %v1135, 7
    %v1137 = vsub.s32 %v441, %v1136
    %v1138 = vrot.slane %v798, %v1137
    %v1139 = vsel %vm446, %v1138, %v1134
    %v1140 = vlaneseq
    %v1141 = vshrl.u32 %v1140, 7
    %v1142 = vsub.s32 %v448, %v1141
    %v1143 = vrot.slane %v799, %v1142
    %v1144 = vsel %vm453, %v1143, %v1139
    %v1145 = vlaneseq
    %v1146 = vshrl.u32 %v1145, 7
    %v1147 = vsub.s32 %v401, %v1146
    %v1148 = vrot.slane %v800, %v1147
    %v1149 = vlaneseq
    %v1150 = vshrl.u32 %v1149, 7
    %v1151 = vsub.s32 %v406, %v1150
    %v1152 = vrot.slane %v801, %v1151
    %v1153 = vsel %vm411, %v1152, %v1148
    %v1154 = vlaneseq
    %v1155 = vshrl.u32 %v1154, 7
    %v1156 = vsub.s32 %v413, %v1155
    %v1157 = vrot.slane %v802, %v1156
    %v1158 = vsel %vm418, %v1157, %v1153
    %v1159 = vlaneseq
    %v1160 = vshrl.u32 %v1159, 7
    %v1161 = vsub.s32 %v420, %v1160
    %v1162 = vrot.slane %v803, %v1161
    %v1163 = vsel %vm425, %v1162, %v1158
    %v1164 = vlaneseq
    %v1165 = vshrl.u32 %v1164, 7
    %v1166 = vsub.s32 %v427, %v1165
    %v1167 = vrot.slane %v804, %v1166
    %v1168 = vsel %vm432, %v1167, %v1163
    %v1169 = vlaneseq
    %v1170 = vshrl.u32 %v1169, 7
    %v1171 = vsub.s32 %v434, %v1170
    %v1172 = vrot.slane %v805, %v1171
    %v1173 = vsel %vm439, %v1172, %v1168
    %v1174 = vlaneseq
    %v1175 = vshrl.u32 %v1174, 7
    %v1176 = vsub.s32 %v441, %v1175
    %v1177 = vrot.slane %v806, %v1176
    %v1178 = vsel %vm446, %v1177, %v1173
    %v1179 = vlaneseq
    %v1180 = vshrl.u32 %v1179, 7
    %v1181 = vsub.s32 %v448, %v1180
    %v1182 = vrot.slane %v807, %v1181
    %v1183 = vsel %vm453, %v1182, %v1178
    %v1184 = vsel %vm728, %v949, %v910
    %v1185 = vsel %vm730, %v988, %v1184
    %v1186 = vsel %vm732, %v1027, %v1185
    %v1187 = vsel %vm734, %v1066, %v1186
    %v1188 = vsel %vm736, %v1105, %v1187
    %v1189 = vsel %vm738, %v1144, %v1188
    %v1190 = vsel %vm740, %v1183, %v1189
    %v1192 = vsel %vm79, %v1190, 0.0
    %1193 = vadd.xlane.f32.xlu0 %v1192
    %v1194 = vpop.xlane.xlu0 %1193
    %v1195 = vmax.f32 %v1194, 1e-24
    %v1196 = vrsqrt.pop %v1195
    %v1197 = vmul.f32 %v1196, 16.0
    %v1199 = vlaneseq
    %v1200 = vshrl.u32 %v1199, 7
    %v1201 = vsub.s32 0, %v1200
    %v1202 = vrot.slane %v1197, %v1201
    %v1203 = vlaneseq
    %v1204 = vshrl.u32 %v1203, 7
    %v1205 = vsub.s32 1, %v1204
    %v1206 = vrot.slane %v1197, %v1205
    %v1207 = vlaneseq
    %v1208 = vshrl.u32 %v1207, 7
    %v1209 = vsub.s32 2, %v1208
    %v1210 = vrot.slane %v1197, %v1209
    %v1211 = vlaneseq
    %v1212 = vshrl.u32 %v1211, 7
    %v1213 = vsub.s32 3, %v1212
    %v1214 = vrot.slane %v1197, %v1213
    %v1215 = vlaneseq
    %v1216 = vshrl.u32 %v1215, 7
    %v1217 = vsub.s32 4, %v1216
    %v1218 = vrot.slane %v1197, %v1217
    %v1219 = vlaneseq
    %v1220 = vshrl.u32 %v1219, 7
    %v1221 = vsub.s32 5, %v1220
    %v1222 = vrot.slane %v1197, %v1221
    %v1223 = vlaneseq
    %v1224 = vshrl.u32 %v1223, 7
    %v1225 = vsub.s32 6, %v1224
    %v1226 = vrot.slane %v1197, %v1225
    %v1227 = vlaneseq
    %v1228 = vshrl.u32 %v1227, 7
    %v1229 = vsub.s32 7, %v1228
    %v1230 = vrot.slane %v1197, %v1229
    %v1239 = vmul.f32 %v272, %v1202
    %v1240 = vmul.f32 %v273, %v1202
    %v1241 = vmul.f32 %v274, %v1202
    %v1242 = vmul.f32 %v275, %v1202
    %v1243 = vmul.f32 %v276, %v1202
    %v1244 = vmul.f32 %v277, %v1202
    %v1245 = vmul.f32 %v278, %v1202
    %v1246 = vmul.f32 %v279, %v1202
    %v1247 = vmul.f32 %v280, %v1206
    %v1248 = vmul.f32 %v281, %v1206
    %v1249 = vmul.f32 %v282, %v1206
    %v1250 = vmul.f32 %v283, %v1206
    %v1251 = vmul.f32 %v284, %v1206
    %v1252 = vmul.f32 %v285, %v1206
    %v1253 = vmul.f32 %v286, %v1206
    %v1254 = vmul.f32 %v287, %v1206
    %v1255 = vmul.f32 %v288, %v1210
    %v1256 = vmul.f32 %v289, %v1210
    %v1257 = vmul.f32 %v290, %v1210
    %v1258 = vmul.f32 %v291, %v1210
    %v1259 = vmul.f32 %v292, %v1210
    %v1260 = vmul.f32 %v293, %v1210
    %v1261 = vmul.f32 %v294, %v1210
    %v1262 = vmul.f32 %v295, %v1210
    %v1263 = vmul.f32 %v296, %v1214
    %v1264 = vmul.f32 %v297, %v1214
    %v1265 = vmul.f32 %v298, %v1214
    %v1266 = vmul.f32 %v299, %v1214
    %v1267 = vmul.f32 %v300, %v1214
    %v1268 = vmul.f32 %v301, %v1214
    %v1269 = vmul.f32 %v302, %v1214
    %v1270 = vmul.f32 %v303, %v1214
    %v1271 = vmul.f32 %v304, %v1218
    %v1272 = vmul.f32 %v305, %v1218
    %v1273 = vmul.f32 %v306, %v1218
    %v1274 = vmul.f32 %v307, %v1218
    %v1275 = vmul.f32 %v308, %v1218
    %v1276 = vmul.f32 %v309, %v1218
    %v1277 = vmul.f32 %v310, %v1218
    %v1278 = vmul.f32 %v311, %v1218
    %v1279 = vmul.f32 %v312, %v1222
    %v1280 = vmul.f32 %v313, %v1222
    %v1281 = vmul.f32 %v314, %v1222
    %v1282 = vmul.f32 %v315, %v1222
    %v1283 = vmul.f32 %v316, %v1222
    %v1284 = vmul.f32 %v317, %v1222
    %v1285 = vmul.f32 %v318, %v1222
    %v1286 = vmul.f32 %v319, %v1222
    %v1287 = vmul.f32 %v320, %v1226
    %v1288 = vmul.f32 %v321, %v1226
    %v1289 = vmul.f32 %v322, %v1226
    %v1290 = vmul.f32 %v323, %v1226
    %v1291 = vmul.f32 %v324, %v1226
    %v1292 = vmul.f32 %v325, %v1226
    %v1293 = vmul.f32 %v326, %v1226
    %v1294 = vmul.f32 %v327, %v1226
    %v1295 = vmul.f32 %v328, %v1230
    %v1296 = vmul.f32 %v329, %v1230
    %v1297 = vmul.f32 %v330, %v1230
    %v1298 = vmul.f32 %v331, %v1230
    %v1299 = vmul.f32 %v332, %v1230
    %v1300 = vmul.f32 %v333, %v1230
    %v1301 = vmul.f32 %v334, %v1230
    %v1302 = vmul.f32 %v335, %v1230
    %v1303 = vld [vmem:[%s1] sm:$0xff]
    %v1304 = vld [vmem:[%s1 + $0x8] sm:$0xff]
    %v1305 = vld [vmem:[%s1 + $0x10] sm:$0xff]
    %v1306 = vld [vmem:[%s1 + $0x18] sm:$0xff]
    %v1307 = vld [vmem:[%s1 + $0x20] sm:$0xff]
    %v1308 = vld [vmem:[%s1 + $0x28] sm:$0xff]
    %v1309 = vld [vmem:[%s1 + $0x30] sm:$0xff]
    %v1310 = vld [vmem:[%s1 + $0x38] sm:$0xff]
    %v1311 = vld [vmem:[%s1 + $0x40] sm:$0xff]
    %v1312 = vld [vmem:[%s1 + $0x48] sm:$0xff]
    %v1313 = vld [vmem:[%s1 + $0x50] sm:$0xff]
    %v1314 = vld [vmem:[%s1 + $0x58] sm:$0xff]
    %v1315 = vld [vmem:[%s1 + $0x60] sm:$0xff]
    %v1316 = vld [vmem:[%s1 + $0x68] sm:$0xff]
    %v1317 = vld [vmem:[%s1 + $0x70] sm:$0xff]
    %v1318 = vld [vmem:[%s1 + $0x78] sm:$0xff]
    %1383 = vset.pattern.permute.xlu0 0
    %1384 = vperm.xlu0 %1383, %v1239
    %v1385 = vpop.permute.xlu0 %1384
    %1386 = vset.pattern.permute.xlu0 0
    %1387 = vperm.xlu0 %1386, %v1240
    %v1388 = vpop.permute.xlu0 %1387
    %1389 = vset.pattern.permute.xlu0 0
    %1390 = vperm.xlu0 %1389, %v1241
    %v1391 = vpop.permute.xlu0 %1390
    %1392 = vset.pattern.permute.xlu0 0
    %1393 = vperm.xlu0 %1392, %v1242
    %v1394 = vpop.permute.xlu0 %1393
    %1395 = vset.pattern.permute.xlu0 0
    %1396 = vperm.xlu0 %1395, %v1243
    %v1397 = vpop.permute.xlu0 %1396
    %1398 = vset.pattern.permute.xlu0 0
    %1399 = vperm.xlu0 %1398, %v1244
    %v1400 = vpop.permute.xlu0 %1399
    %1401 = vset.pattern.permute.xlu0 0
    %1402 = vperm.xlu0 %1401, %v1245
    %v1403 = vpop.permute.xlu0 %1402
    %1404 = vset.pattern.permute.xlu0 0
    %1405 = vperm.xlu0 %1404, %v1246
    %v1406 = vpop.permute.xlu0 %1405
    %1407 = vset.pattern.permute.xlu0 0
    %1408 = vperm.xlu0 %1407, %v1247
    %v1409 = vpop.permute.xlu0 %1408
    %1410 = vset.pattern.permute.xlu0 0
    %1411 = vperm.xlu0 %1410, %v1248
    %v1412 = vpop.permute.xlu0 %1411
    %1413 = vset.pattern.permute.xlu0 0
    %1414 = vperm.xlu0 %1413, %v1249
    %v1415 = vpop.permute.xlu0 %1414
    %1416 = vset.pattern.permute.xlu0 0
    %1417 = vperm.xlu0 %1416, %v1250
    %v1418 = vpop.permute.xlu0 %1417
    %1419 = vset.pattern.permute.xlu0 0
    %1420 = vperm.xlu0 %1419, %v1251
    %v1421 = vpop.permute.xlu0 %1420
    %1422 = vset.pattern.permute.xlu0 0
    %1423 = vperm.xlu0 %1422, %v1252
    %v1424 = vpop.permute.xlu0 %1423
    %1425 = vset.pattern.permute.xlu0 0
    %1426 = vperm.xlu0 %1425, %v1253
    %v1427 = vpop.permute.xlu0 %1426
    %1428 = vset.pattern.permute.xlu0 0
    %1429 = vperm.xlu0 %1428, %v1254
    %v1430 = vpop.permute.xlu0 %1429
    %1431 = vset.pattern.permute.xlu0 0
    %1432 = vperm.xlu0 %1431, %v1255
    %v1433 = vpop.permute.xlu0 %1432
    %1434 = vset.pattern.permute.xlu0 0
    %1435 = vperm.xlu0 %1434, %v1256
    %v1436 = vpop.permute.xlu0 %1435
    %1437 = vset.pattern.permute.xlu0 0
    %1438 = vperm.xlu0 %1437, %v1257
    %v1439 = vpop.permute.xlu0 %1438
    %1440 = vset.pattern.permute.xlu0 0
    %1441 = vperm.xlu0 %1440, %v1258
    %v1442 = vpop.permute.xlu0 %1441
    %1443 = vset.pattern.permute.xlu0 0
    %1444 = vperm.xlu0 %1443, %v1259
    %v1445 = vpop.permute.xlu0 %1444
    %1446 = vset.pattern.permute.xlu0 0
    %1447 = vperm.xlu0 %1446, %v1260
    %v1448 = vpop.permute.xlu0 %1447
    %1449 = vset.pattern.permute.xlu0 0
    %1450 = vperm.xlu0 %1449, %v1261
    %v1451 = vpop.permute.xlu0 %1450
    %1452 = vset.pattern.permute.xlu0 0
    %1453 = vperm.xlu0 %1452, %v1262
    %v1454 = vpop.permute.xlu0 %1453
    %1455 = vset.pattern.permute.xlu0 0
    %1456 = vperm.xlu0 %1455, %v1263
    %v1457 = vpop.permute.xlu0 %1456
    %1458 = vset.pattern.permute.xlu0 0
    %1459 = vperm.xlu0 %1458, %v1264
    %v1460 = vpop.permute.xlu0 %1459
    %1461 = vset.pattern.permute.xlu0 0
    %1462 = vperm.xlu0 %1461, %v1265
    %v1463 = vpop.permute.xlu0 %1462
    %1464 = vset.pattern.permute.xlu0 0
    %1465 = vperm.xlu0 %1464, %v1266
    %v1466 = vpop.permute.xlu0 %1465
    %1467 = vset.pattern.permute.xlu0 0
    %1468 = vperm.xlu0 %1467, %v1267
    %v1469 = vpop.permute.xlu0 %1468
    %1470 = vset.pattern.permute.xlu0 0
    %1471 = vperm.xlu0 %1470, %v1268
    %v1472 = vpop.permute.xlu0 %1471
    %1473 = vset.pattern.permute.xlu0 0
    %1474 = vperm.xlu0 %1473, %v1269
    %v1475 = vpop.permute.xlu0 %1474
    %1476 = vset.pattern.permute.xlu0 0
    %1477 = vperm.xlu0 %1476, %v1270
    %v1478 = vpop.permute.xlu0 %1477
    %1479 = vset.pattern.permute.xlu0 0
    %1480 = vperm.xlu0 %1479, %v1271
    %v1481 = vpop.permute.xlu0 %1480
    %1482 = vset.pattern.permute.xlu0 0
    %1483 = vperm.xlu0 %1482, %v1272
    %v1484 = vpop.permute.xlu0 %1483
    %1485 = vset.pattern.permute.xlu0 0
    %1486 = vperm.xlu0 %1485, %v1273
    %v1487 = vpop.permute.xlu0 %1486
    %1488 = vset.pattern.permute.xlu0 0
    %1489 = vperm.xlu0 %1488, %v1274
    %v1490 = vpop.permute.xlu0 %1489
    %1491 = vset.pattern.permute.xlu0 0
    %1492 = vperm.xlu0 %1491, %v1275
    %v1493 = vpop.permute.xlu0 %1492
    %1494 = vset.pattern.permute.xlu0 0
    %1495 = vperm.xlu0 %1494, %v1276
    %v1496 = vpop.permute.xlu0 %1495
    %1497 = vset.pattern.permute.xlu0 0
    %1498 = vperm.xlu0 %1497, %v1277
    %v1499 = vpop.permute.xlu0 %1498
    %1500 = vset.pattern.permute.xlu0 0
    %1501 = vperm.xlu0 %1500, %v1278
    %v1502 = vpop.permute.xlu0 %1501
    %1503 = vset.pattern.permute.xlu0 0
    %1504 = vperm.xlu0 %1503, %v1279
    %v1505 = vpop.permute.xlu0 %1504
    %1506 = vset.pattern.permute.xlu0 0
    %1507 = vperm.xlu0 %1506, %v1280
    %v1508 = vpop.permute.xlu0 %1507
    %1509 = vset.pattern.permute.xlu0 0
    %1510 = vperm.xlu0 %1509, %v1281
    %v1511 = vpop.permute.xlu0 %1510
    %1512 = vset.pattern.permute.xlu0 0
    %1513 = vperm.xlu0 %1512, %v1282
    %v1514 = vpop.permute.xlu0 %1513
    %1515 = vset.pattern.permute.xlu0 0
    %1516 = vperm.xlu0 %1515, %v1283
    %v1517 = vpop.permute.xlu0 %1516
    %1518 = vset.pattern.permute.xlu0 0
    %1519 = vperm.xlu0 %1518, %v1284
    %v1520 = vpop.permute.xlu0 %1519
    %1521 = vset.pattern.permute.xlu0 0
    %1522 = vperm.xlu0 %1521, %v1285
    %v1523 = vpop.permute.xlu0 %1522
    %1524 = vset.pattern.permute.xlu0 0
    %1525 = vperm.xlu0 %1524, %v1286
    %v1526 = vpop.permute.xlu0 %1525
    %1527 = vset.pattern.permute.xlu0 0
    %1528 = vperm.xlu0 %1527, %v1287
    %v1529 = vpop.permute.xlu0 %1528
    %1530 = vset.pattern.permute.xlu0 0
    %1531 = vperm.xlu0 %1530, %v1288
    %v1532 = vpop.permute.xlu0 %1531
    %1533 = vset.pattern.permute.xlu0 0
    %1534 = vperm.xlu0 %1533, %v1289
    %v1535 = vpop.permute.xlu0 %1534
    %1536 = vset.pattern.permute.xlu0 0
    %1537 = vperm.xlu0 %1536, %v1290
    %v1538 = vpop.permute.xlu0 %1537
    %1539 = vset.pattern.permute.xlu0 0
    %1540 = vperm.xlu0 %1539, %v1291
    %v1541 = vpop.permute.xlu0 %1540
    %1542 = vset.pattern.permute.xlu0 0
    %1543 = vperm.xlu0 %1542, %v1292
    %v1544 = vpop.permute.xlu0 %1543
    %1545 = vset.pattern.permute.xlu0 0
    %1546 = vperm.xlu0 %1545, %v1293
    %v1547 = vpop.permute.xlu0 %1546
    %1548 = vset.pattern.permute.xlu0 0
    %1549 = vperm.xlu0 %1548, %v1294
    %v1550 = vpop.permute.xlu0 %1549
    %1551 = vset.pattern.permute.xlu0 0
    %1552 = vperm.xlu0 %1551, %v1295
    %v1553 = vpop.permute.xlu0 %1552
    %1554 = vset.pattern.permute.xlu0 0
    %1555 = vperm.xlu0 %1554, %v1296
    %v1556 = vpop.permute.xlu0 %1555
    %1557 = vset.pattern.permute.xlu0 0
    %1558 = vperm.xlu0 %1557, %v1297
    %v1559 = vpop.permute.xlu0 %1558
    %1560 = vset.pattern.permute.xlu0 0
    %1561 = vperm.xlu0 %1560, %v1298
    %v1562 = vpop.permute.xlu0 %1561
    %1563 = vset.pattern.permute.xlu0 0
    %1564 = vperm.xlu0 %1563, %v1299
    %v1565 = vpop.permute.xlu0 %1564
    %1566 = vset.pattern.permute.xlu0 0
    %1567 = vperm.xlu0 %1566, %v1300
    %v1568 = vpop.permute.xlu0 %1567
    %1569 = vset.pattern.permute.xlu0 0
    %1570 = vperm.xlu0 %1569, %v1301
    %v1571 = vpop.permute.xlu0 %1570
    %1572 = vset.pattern.permute.xlu0 0
    %1573 = vperm.xlu0 %1572, %v1302
    %v1574 = vpop.permute.xlu0 %1573
    %v1575 = vlaneseq
    %v1576 = vshrl.u32 %v1575, 7
    %v1577 = vsub.s32 %v401, %v1576
    %v1578 = vrot.slane %v1385, %v1577
    %v1579 = vlaneseq
    %v1580 = vshrl.u32 %v1579, 7
    %v1581 = vsub.s32 %v406, %v1580
    %v1582 = vrot.slane %v1388, %v1581
    %v1583 = vsel %vm411, %v1582, %v1578
    %v1584 = vlaneseq
    %v1585 = vshrl.u32 %v1584, 7
    %v1586 = vsub.s32 %v413, %v1585
    %v1587 = vrot.slane %v1391, %v1586
    %v1588 = vsel %vm418, %v1587, %v1583
    %v1589 = vlaneseq
    %v1590 = vshrl.u32 %v1589, 7
    %v1591 = vsub.s32 %v420, %v1590
    %v1592 = vrot.slane %v1394, %v1591
    %v1593 = vsel %vm425, %v1592, %v1588
    %v1594 = vlaneseq
    %v1595 = vshrl.u32 %v1594, 7
    %v1596 = vsub.s32 %v427, %v1595
    %v1597 = vrot.slane %v1397, %v1596
    %v1598 = vsel %vm432, %v1597, %v1593
    %v1599 = vlaneseq
    %v1600 = vshrl.u32 %v1599, 7
    %v1601 = vsub.s32 %v434, %v1600
    %v1602 = vrot.slane %v1400, %v1601
    %v1603 = vsel %vm439, %v1602, %v1598
    %v1604 = vlaneseq
    %v1605 = vshrl.u32 %v1604, 7
    %v1606 = vsub.s32 %v441, %v1605
    %v1607 = vrot.slane %v1403, %v1606
    %v1608 = vsel %vm446, %v1607, %v1603
    %v1609 = vlaneseq
    %v1610 = vshrl.u32 %v1609, 7
    %v1611 = vsub.s32 %v448, %v1610
    %v1612 = vrot.slane %v1406, %v1611
    %v1613 = vsel %vm453, %v1612, %v1608
    %v1614 = vlaneseq
    %v1615 = vshrl.u32 %v1614, 7
    %v1616 = vsub.s32 %v401, %v1615
    %v1617 = vrot.slane %v1409, %v1616
    %v1618 = vlaneseq
    %v1619 = vshrl.u32 %v1618, 7
    %v1620 = vsub.s32 %v406, %v1619
    %v1621 = vrot.slane %v1412, %v1620
    %v1622 = vsel %vm411, %v1621, %v1617
    %v1623 = vlaneseq
    %v1624 = vshrl.u32 %v1623, 7
    %v1625 = vsub.s32 %v413, %v1624
    %v1626 = vrot.slane %v1415, %v1625
    %v1627 = vsel %vm418, %v1626, %v1622
    %v1628 = vlaneseq
    %v1629 = vshrl.u32 %v1628, 7
    %v1630 = vsub.s32 %v420, %v1629
    %v1631 = vrot.slane %v1418, %v1630
    %v1632 = vsel %vm425, %v1631, %v1627
    %v1633 = vlaneseq
    %v1634 = vshrl.u32 %v1633, 7
    %v1635 = vsub.s32 %v427, %v1634
    %v1636 = vrot.slane %v1421, %v1635
    %v1637 = vsel %vm432, %v1636, %v1632
    %v1638 = vlaneseq
    %v1639 = vshrl.u32 %v1638, 7
    %v1640 = vsub.s32 %v434, %v1639
    %v1641 = vrot.slane %v1424, %v1640
    %v1642 = vsel %vm439, %v1641, %v1637
    %v1643 = vlaneseq
    %v1644 = vshrl.u32 %v1643, 7
    %v1645 = vsub.s32 %v441, %v1644
    %v1646 = vrot.slane %v1427, %v1645
    %v1647 = vsel %vm446, %v1646, %v1642
    %v1648 = vlaneseq
    %v1649 = vshrl.u32 %v1648, 7
    %v1650 = vsub.s32 %v448, %v1649
    %v1651 = vrot.slane %v1430, %v1650
    %v1652 = vsel %vm453, %v1651, %v1647
    %v1653 = vlaneseq
    %v1654 = vshrl.u32 %v1653, 7
    %v1655 = vsub.s32 %v401, %v1654
    %v1656 = vrot.slane %v1433, %v1655
    %v1657 = vlaneseq
    %v1658 = vshrl.u32 %v1657, 7
    %v1659 = vsub.s32 %v406, %v1658
    %v1660 = vrot.slane %v1436, %v1659
    %v1661 = vsel %vm411, %v1660, %v1656
    %v1662 = vlaneseq
    %v1663 = vshrl.u32 %v1662, 7
    %v1664 = vsub.s32 %v413, %v1663
    %v1665 = vrot.slane %v1439, %v1664
    %v1666 = vsel %vm418, %v1665, %v1661
    %v1667 = vlaneseq
    %v1668 = vshrl.u32 %v1667, 7
    %v1669 = vsub.s32 %v420, %v1668
    %v1670 = vrot.slane %v1442, %v1669
    %v1671 = vsel %vm425, %v1670, %v1666
    %v1672 = vlaneseq
    %v1673 = vshrl.u32 %v1672, 7
    %v1674 = vsub.s32 %v427, %v1673
    %v1675 = vrot.slane %v1445, %v1674
    %v1676 = vsel %vm432, %v1675, %v1671
    %v1677 = vlaneseq
    %v1678 = vshrl.u32 %v1677, 7
    %v1679 = vsub.s32 %v434, %v1678
    %v1680 = vrot.slane %v1448, %v1679
    %v1681 = vsel %vm439, %v1680, %v1676
    %v1682 = vlaneseq
    %v1683 = vshrl.u32 %v1682, 7
    %v1684 = vsub.s32 %v441, %v1683
    %v1685 = vrot.slane %v1451, %v1684
    %v1686 = vsel %vm446, %v1685, %v1681
    %v1687 = vlaneseq
    %v1688 = vshrl.u32 %v1687, 7
    %v1689 = vsub.s32 %v448, %v1688
    %v1690 = vrot.slane %v1454, %v1689
    %v1691 = vsel %vm453, %v1690, %v1686
    %v1692 = vlaneseq
    %v1693 = vshrl.u32 %v1692, 7
    %v1694 = vsub.s32 %v401, %v1693
    %v1695 = vrot.slane %v1457, %v1694
    %v1696 = vlaneseq
    %v1697 = vshrl.u32 %v1696, 7
    %v1698 = vsub.s32 %v406, %v1697
    %v1699 = vrot.slane %v1460, %v1698
    %v1700 = vsel %vm411, %v1699, %v1695
    %v1701 = vlaneseq
    %v1702 = vshrl.u32 %v1701, 7
    %v1703 = vsub.s32 %v413, %v1702
    %v1704 = vrot.slane %v1463, %v1703
    %v1705 = vsel %vm418, %v1704, %v1700
    %v1706 = vlaneseq
    %v1707 = vshrl.u32 %v1706, 7
    %v1708 = vsub.s32 %v420, %v1707
    %v1709 = vrot.slane %v1466, %v1708
    %v1710 = vsel %vm425, %v1709, %v1705
    %v1711 = vlaneseq
    %v1712 = vshrl.u32 %v1711, 7
    %v1713 = vsub.s32 %v427, %v1712
    %v1714 = vrot.slane %v1469, %v1713
    %v1715 = vsel %vm432, %v1714, %v1710
    %v1716 = vlaneseq
    %v1717 = vshrl.u32 %v1716, 7
    %v1718 = vsub.s32 %v434, %v1717
    %v1719 = vrot.slane %v1472, %v1718
    %v1720 = vsel %vm439, %v1719, %v1715
    %v1721 = vlaneseq
    %v1722 = vshrl.u32 %v1721, 7
    %v1723 = vsub.s32 %v441, %v1722
    %v1724 = vrot.slane %v1475, %v1723
    %v1725 = vsel %vm446, %v1724, %v1720
    %v1726 = vlaneseq
    %v1727 = vshrl.u32 %v1726, 7
    %v1728 = vsub.s32 %v448, %v1727
    %v1729 = vrot.slane %v1478, %v1728
    %v1730 = vsel %vm453, %v1729, %v1725
    %v1731 = vlaneseq
    %v1732 = vshrl.u32 %v1731, 7
    %v1733 = vsub.s32 %v401, %v1732
    %v1734 = vrot.slane %v1481, %v1733
    %v1735 = vlaneseq
    %v1736 = vshrl.u32 %v1735, 7
    %v1737 = vsub.s32 %v406, %v1736
    %v1738 = vrot.slane %v1484, %v1737
    %v1739 = vsel %vm411, %v1738, %v1734
    %v1740 = vlaneseq
    %v1741 = vshrl.u32 %v1740, 7
    %v1742 = vsub.s32 %v413, %v1741
    %v1743 = vrot.slane %v1487, %v1742
    %v1744 = vsel %vm418, %v1743, %v1739
    %v1745 = vlaneseq
    %v1746 = vshrl.u32 %v1745, 7
    %v1747 = vsub.s32 %v420, %v1746
    %v1748 = vrot.slane %v1490, %v1747
    %v1749 = vsel %vm425, %v1748, %v1744
    %v1750 = vlaneseq
    %v1751 = vshrl.u32 %v1750, 7
    %v1752 = vsub.s32 %v427, %v1751
    %v1753 = vrot.slane %v1493, %v1752
    %v1754 = vsel %vm432, %v1753, %v1749
    %v1755 = vlaneseq
    %v1756 = vshrl.u32 %v1755, 7
    %v1757 = vsub.s32 %v434, %v1756
    %v1758 = vrot.slane %v1496, %v1757
    %v1759 = vsel %vm439, %v1758, %v1754
    %v1760 = vlaneseq
    %v1761 = vshrl.u32 %v1760, 7
    %v1762 = vsub.s32 %v441, %v1761
    %v1763 = vrot.slane %v1499, %v1762
    %v1764 = vsel %vm446, %v1763, %v1759
    %v1765 = vlaneseq
    %v1766 = vshrl.u32 %v1765, 7
    %v1767 = vsub.s32 %v448, %v1766
    %v1768 = vrot.slane %v1502, %v1767
    %v1769 = vsel %vm453, %v1768, %v1764
    %v1770 = vlaneseq
    %v1771 = vshrl.u32 %v1770, 7
    %v1772 = vsub.s32 %v401, %v1771
    %v1773 = vrot.slane %v1505, %v1772
    %v1774 = vlaneseq
    %v1775 = vshrl.u32 %v1774, 7
    %v1776 = vsub.s32 %v406, %v1775
    %v1777 = vrot.slane %v1508, %v1776
    %v1778 = vsel %vm411, %v1777, %v1773
    %v1779 = vlaneseq
    %v1780 = vshrl.u32 %v1779, 7
    %v1781 = vsub.s32 %v413, %v1780
    %v1782 = vrot.slane %v1511, %v1781
    %v1783 = vsel %vm418, %v1782, %v1778
    %v1784 = vlaneseq
    %v1785 = vshrl.u32 %v1784, 7
    %v1786 = vsub.s32 %v420, %v1785
    %v1787 = vrot.slane %v1514, %v1786
    %v1788 = vsel %vm425, %v1787, %v1783
    %v1789 = vlaneseq
    %v1790 = vshrl.u32 %v1789, 7
    %v1791 = vsub.s32 %v427, %v1790
    %v1792 = vrot.slane %v1517, %v1791
    %v1793 = vsel %vm432, %v1792, %v1788
    %v1794 = vlaneseq
    %v1795 = vshrl.u32 %v1794, 7
    %v1796 = vsub.s32 %v434, %v1795
    %v1797 = vrot.slane %v1520, %v1796
    %v1798 = vsel %vm439, %v1797, %v1793
    %v1799 = vlaneseq
    %v1800 = vshrl.u32 %v1799, 7
    %v1801 = vsub.s32 %v441, %v1800
    %v1802 = vrot.slane %v1523, %v1801
    %v1803 = vsel %vm446, %v1802, %v1798
    %v1804 = vlaneseq
    %v1805 = vshrl.u32 %v1804, 7
    %v1806 = vsub.s32 %v448, %v1805
    %v1807 = vrot.slane %v1526, %v1806
    %v1808 = vsel %vm453, %v1807, %v1803
    %v1809 = vlaneseq
    %v1810 = vshrl.u32 %v1809, 7
    %v1811 = vsub.s32 %v401, %v1810
    %v1812 = vrot.slane %v1529, %v1811
    %v1813 = vlaneseq
    %v1814 = vshrl.u32 %v1813, 7
    %v1815 = vsub.s32 %v406, %v1814
    %v1816 = vrot.slane %v1532, %v1815
    %v1817 = vsel %vm411, %v1816, %v1812
    %v1818 = vlaneseq
    %v1819 = vshrl.u32 %v1818, 7
    %v1820 = vsub.s32 %v413, %v1819
    %v1821 = vrot.slane %v1535, %v1820
    %v1822 = vsel %vm418, %v1821, %v1817
    %v1823 = vlaneseq
    %v1824 = vshrl.u32 %v1823, 7
    %v1825 = vsub.s32 %v420, %v1824
    %v1826 = vrot.slane %v1538, %v1825
    %v1827 = vsel %vm425, %v1826, %v1822
    %v1828 = vlaneseq
    %v1829 = vshrl.u32 %v1828, 7
    %v1830 = vsub.s32 %v427, %v1829
    %v1831 = vrot.slane %v1541, %v1830
    %v1832 = vsel %vm432, %v1831, %v1827
    %v1833 = vlaneseq
    %v1834 = vshrl.u32 %v1833, 7
    %v1835 = vsub.s32 %v434, %v1834
    %v1836 = vrot.slane %v1544, %v1835
    %v1837 = vsel %vm439, %v1836, %v1832
    %v1838 = vlaneseq
    %v1839 = vshrl.u32 %v1838, 7
    %v1840 = vsub.s32 %v441, %v1839
    %v1841 = vrot.slane %v1547, %v1840
    %v1842 = vsel %vm446, %v1841, %v1837
    %v1843 = vlaneseq
    %v1844 = vshrl.u32 %v1843, 7
    %v1845 = vsub.s32 %v448, %v1844
    %v1846 = vrot.slane %v1550, %v1845
    %v1847 = vsel %vm453, %v1846, %v1842
    %v1848 = vlaneseq
    %v1849 = vshrl.u32 %v1848, 7
    %v1850 = vsub.s32 %v401, %v1849
    %v1851 = vrot.slane %v1553, %v1850
    %v1852 = vlaneseq
    %v1853 = vshrl.u32 %v1852, 7
    %v1854 = vsub.s32 %v406, %v1853
    %v1855 = vrot.slane %v1556, %v1854
    %v1856 = vsel %vm411, %v1855, %v1851
    %v1857 = vlaneseq
    %v1858 = vshrl.u32 %v1857, 7
    %v1859 = vsub.s32 %v413, %v1858
    %v1860 = vrot.slane %v1559, %v1859
    %v1861 = vsel %vm418, %v1860, %v1856
    %v1862 = vlaneseq
    %v1863 = vshrl.u32 %v1862, 7
    %v1864 = vsub.s32 %v420, %v1863
    %v1865 = vrot.slane %v1562, %v1864
    %v1866 = vsel %vm425, %v1865, %v1861
    %v1867 = vlaneseq
    %v1868 = vshrl.u32 %v1867, 7
    %v1869 = vsub.s32 %v427, %v1868
    %v1870 = vrot.slane %v1565, %v1869
    %v1871 = vsel %vm432, %v1870, %v1866
    %v1872 = vlaneseq
    %v1873 = vshrl.u32 %v1872, 7
    %v1874 = vsub.s32 %v434, %v1873
    %v1875 = vrot.slane %v1568, %v1874
    %v1876 = vsel %vm439, %v1875, %v1871
    %v1877 = vlaneseq
    %v1878 = vshrl.u32 %v1877, 7
    %v1879 = vsub.s32 %v441, %v1878
    %v1880 = vrot.slane %v1571, %v1879
    %v1881 = vsel %vm446, %v1880, %v1876
    %v1882 = vlaneseq
    %v1883 = vshrl.u32 %v1882, 7
    %v1884 = vsub.s32 %v448, %v1883
    %v1885 = vrot.slane %v1574, %v1884
    %v1886 = vsel %vm453, %v1885, %v1881
    %v1887 = vsel %vm728, %v1652, %v1613
    %v1888 = vsel %vm730, %v1691, %v1887
    %v1889 = vsel %vm732, %v1730, %v1888
    %v1890 = vsel %vm734, %v1769, %v1889
    %v1891 = vsel %vm736, %v1808, %v1890
    %v1892 = vsel %vm738, %v1847, %v1891
    %v1893 = vsel %vm740, %v1886, %v1892
    %v1894 = vsel %vm79, %v1893, 0
    %v1897 = vsel %vm79, %v1303, 0
    %v1900 = vsel %vm79, %v1304, 0
    %v1903 = vsel %vm79, %v1305, 0
    %v1906 = vsel %vm79, %v1306, 0
    %v1909 = vsel %vm79, %v1307, 0
    %v1912 = vsel %vm79, %v1308, 0
    %v1915 = vsel %vm79, %v1309, 0
    %v1918 = vsel %vm79, %v1310, 0
    %v1921 = vsel %vm79, %v1311, 0
    %v1924 = vsel %vm79, %v1312, 0
    %v1927 = vsel %vm79, %v1313, 0
    %v1930 = vsel %vm79, %v1314, 0
    %v1933 = vsel %vm79, %v1315, 0
    %v1936 = vsel %vm79, %v1316, 0
    %v1939 = vsel %vm79, %v1317, 0
    %v1942 = vsel %vm79, %v1318, 0
    %1944 = vmatprep.subr.mxu0 0.0
    %1945 = vmatpush1.xpose.msra.mxu0 %v1897
    %1946 = vmatprep.subr.mxu0 0.0
    %1947 = vmatpush1.xpose.msra.mxu0 %v1900
    %1948 = vmatprep.subr.mxu0 0.0
    %1949 = vmatpush1.xpose.msra.mxu0 %v1903
    %1950 = vmatprep.subr.mxu0 0.0
    %1951 = vmatpush1.xpose.msra.mxu0 %v1906
    %1952 = vmatprep.subr.mxu0 0.0
    %1953 = vmatpush1.xpose.msra.mxu0 %v1909
    %1954 = vmatprep.subr.mxu0 0.0
    %1955 = vmatpush1.xpose.msra.mxu0 %v1912
    %1956 = vmatprep.subr.mxu0 0.0
    %1957 = vmatpush1.xpose.msra.mxu0 %v1915
    %1958 = vmatprep.subr.mxu0 0.0
    %1959 = vmatpush1.xpose.msra.mxu0 %v1918
    %1960 = vmatprep.subr.mxu0 0.0
    %1961 = vmatpush1.xpose.msra.mxu0 %v1921
    %1962 = vmatprep.subr.mxu0 0.0
    %1963 = vmatpush1.xpose.msra.mxu0 %v1924
    %1964 = vmatprep.subr.mxu0 0.0
    %1965 = vmatpush1.xpose.msra.mxu0 %v1927
    %1966 = vmatprep.subr.mxu0 0.0
    %1967 = vmatpush1.xpose.msra.mxu0 %v1930
    %1968 = vmatprep.subr.mxu0 0.0
    %1969 = vmatpush1.xpose.msra.mxu0 %v1933
    %1970 = vmatprep.subr.mxu0 0.0
    %1971 = vmatpush1.xpose.msra.mxu0 %v1936
    %1972 = vmatprep.subr.mxu0 0.0
    %1973 = vmatpush1.xpose.msra.mxu0 %v1939
    %1974 = vmatprep.subr.mxu0 0.0
    %1975 = vmatpush1.xpose.msra.mxu0 %v1942
    %1976 = vmatprep.subr.mxu0 0.0
    %1977 = vmatpush1.xpose.msra.mxu0 0.0
    %1978 = vmatprep.subr.mxu0 0.0
    %1979 = vmatpush1.xpose.msra.mxu0 0.0
    %1980 = vmatprep.subr.mxu0 0.0
    %1981 = vmatpush1.xpose.msra.mxu0 0.0
    %1982 = vmatprep.subr.mxu0 0.0
    %1983 = vmatpush1.xpose.msra.mxu0 0.0
    %1984 = vmatprep.subr.mxu0 0.0
    %1985 = vmatpush1.xpose.msra.mxu0 0.0
    %1986 = vmatprep.subr.mxu0 0.0
    %1987 = vmatpush1.xpose.msra.mxu0 0.0
    %1988 = vmatprep.subr.mxu0 0.0
    %1989 = vmatpush1.xpose.msra.mxu0 0.0
    %1990 = vmatprep.subr.mxu0 0.0
    %1991 = vmatpush1.xpose.msra.mxu0 0.0
    %1992 = vmatprep.subr.mxu0 0.0
    %1993 = vmatpush1.xpose.msra.mxu0 0.0
    %1994 = vmatprep.subr.mxu0 0.0
    %1995 = vmatpush1.xpose.msra.mxu0 0.0
    %1996 = vmatprep.subr.mxu0 0.0
    %1997 = vmatpush1.xpose.msra.mxu0 0.0
    %1998 = vmatprep.subr.mxu0 0.0
    %1999 = vmatpush1.xpose.msra.mxu0 0.0
    %2000 = vmatprep.subr.mxu0 0.0
    %2001 = vmatpush1.xpose.msra.mxu0 0.0
    %2002 = vmatprep.subr.mxu0 0.0
    %2003 = vmatpush1.xpose.msra.mxu0 0.0
    %2004 = vmatprep.subr.mxu0 0.0
    %2005 = vmatpush1.xpose.msra.mxu0 0.0
    %2006 = vmatprep.subr.mxu0 0.0
    %2007 = vmatpush1.xpose.msra.mxu0 0.0
    %2008 = vmatprep.mubr.f32.mxu0 0.0
    %2009 = vmatmul.mubr.f32.gmra.mrb[0].mxu0 %v1894
    %v2010 = vpop.f32.mrb[0].mxu0
    %v2011 = vadd.f32 0.0, %v2010
    %v2012 = vpop.f32.mrb[0].mxu0
    %2013 = vdwg.mxu0
    %2014 = vst [vmem:[#allocation4] sm:$0xff] %v2011
    // Predicated region
    $region10: #{tpu_custom_call.1} parent=1 // pred_check
      _
    $region11: #{tpu_custom_call.1} parent=1 // pred_check_branch
      %2016 = sbr.rel (0) target = $region13
    $region12: #{tpu_custom_call.1} parent=1 // pred_region
      %s2018 = ssub.s32 128, 32
      %2019 = vsyncadd [#allocation3], %s2018
      %s2020 = sshll.u32 [#allocation2], 4
      %s2021 = int_to_ptr.vmem [resolvable:$true] %s2020
      %2026 = dma.vmem_to_hbm [thread:$0]  %s2021, 32, %s2, [#allocation3], 32, 32, 2
    $region13: #{tpu_custom_call.1} parent=1 // pred_fallthru
      _
    // Predicated region
    $region14: #{tpu_custom_call.1} parent=1 // pred_check
      _
    $region15: #{tpu_custom_call.1} parent=1 // pred_check_branch
      %2028 = sbr.rel (0) target = $region17
    $region16: #{tpu_custom_call.1} parent=1 // pred_region
      %s2030 = ssub.s32 128, 32
      %2031 = vsyncadd [#allocation5], %s2030
      %s2032 = sshll.u32 [#allocation4], 4
      %s2033 = int_to_ptr.vmem [resolvable:$true] %s2032
      %2038 = dma.vmem_to_hbm [thread:$0]  %s2033, 32, %s3, [#allocation5], 32, 32, 2
    $region17: #{tpu_custom_call.1} parent=1 // pred_fallthru
      _
    // Predicated region
    $region18: #{tpu_custom_call.1} parent=1 // pred_check
      _
    $region19: #{tpu_custom_call.1} parent=1 // pred_check_branch
      %2040 = sbr.rel (0) target = $region21
    $region20: #{tpu_custom_call.1} parent=1 // pred_region
      %2041 = dma.done [#allocation3], 128
    $region21: #{tpu_custom_call.1} parent=1 // pred_fallthru
      _
    // Predicated region
    $region22: #{tpu_custom_call.1} parent=1 // pred_check
      _
    $region23: #{tpu_custom_call.1} parent=1 // pred_check_branch
      %2043 = sbr.rel (0) target = $region25
    $region24: #{tpu_custom_call.1} parent=1 // pred_region
      %2044 = dma.done [#allocation5], 128
    $region25: #{tpu_custom_call.1} parent=1 // pred_fallthru
      _
    %2045 = vsyncpa [#allocation3], 1
    %2046 = vsyncpa [#allocation5], 1

</llo_original>
